<compile_context>
chip_gen: v5e
topology: v5e:2x2
jax: 0.10.0
libtpu: 0.0.40
codegen_flags: <defaults>
</compile_context>

<pallas_src>
import numpy as np
import jax
import jax.numpy as jnp
from jax import lax
from jax.experimental import pallas as pl
from jax.experimental.pallas import tpu as pltpu


def _round_up(x, m):
    return (x + m - 1) // m * m


def gru_fc_kernel(x2d_ref, wx_ref, wh_rz_ref, wh_n_ref, bx_ref, bhn_ref,
                  wfc_ref, bfc_ref, out_ref, gx_ref):
    TB = gx_ref.shape[0]
    Bp = out_ref.shape[0]
    Hp = wh_n_ref.shape[1]
    T = TB // Bp

    # (1) Hoisted batched MXU pass (bf16 operands, f32 accumulate): input
    #     projections for ALL timesteps at once, gate-blocked layout [r | z | n]
    #     with each gate padded to Hp lanes, biases (b_ih+b_hh for r/z, b_ih for
    #     n) folded in.
    gx_ref[...] = (
        jnp.dot(x2d_ref[...], wx_ref[...], preferred_element_type=jnp.float32)
        + bx_ref[...]
    )

    # Hoist the n-gate hidden bias broadcast out of the time loop.
    bhn = jnp.broadcast_to(bhn_ref[...], (Bp, Hp))

    def step(t, h):
        row = pl.multiple_of(t * Bp, 8)
        g_x = gx_ref[pl.ds(row, Bp), :]                       # (Bp, 3Hp) f32
        h_b = h.astype(jnp.bfloat16)                          # bf16 only at MXU boundary
        # Split recurrent dot: r|z block first so the EUP sigmoids can start
        # while the MXU still works on the n block.
        g_rz = jnp.dot(h_b, wh_rz_ref[...], preferred_element_type=jnp.float32)
        g_n = jnp.dot(h_b, wh_n_ref[...], preferred_element_type=jnp.float32)
        # PyTorch gate order r, z, n; each gate is a full 128-lane block.
        r = jax.nn.sigmoid(g_x[:, 0:Hp] + g_rz[:, 0:Hp])
        z = jax.nn.sigmoid(g_x[:, Hp:2 * Hp] + g_rz[:, Hp:2 * Hp])
        n = jnp.tanh(g_x[:, 2 * Hp:3 * Hp] + r * (g_n + bhn))
        return (1.0 - z) * n + z * h                          # f32 carry

    h0 = jnp.zeros((Bp, Hp), jnp.float32)
    h_final = lax.fori_loop(0, T, step, h0, unroll=True if T <= 32 else 4)

    out = (jnp.dot(h_final.astype(jnp.bfloat16), wfc_ref[...],
                   preferred_element_type=jnp.float32)
           + bfc_ref[...])
    out_ref[...] = out.astype(out_ref.dtype)


def pack_params(params, Hp, Op):
    """Repack canonical PyTorch-layout GRU/Linear params into padded,
    lane-aligned kernel tensors. Weights -> bf16 (MXU operands), biases -> f32."""
    w_ih = params["w_ih"].astype(jnp.float32)   # (3H, D)
    w_hh = params["w_hh"].astype(jnp.float32)   # (3H, H)
    b_ih = params["b_ih"].astype(jnp.float32)   # (3H,)
    b_hh = params["b_hh"].astype(jnp.float32)   # (3H,)
    w_fc = params["w_fc"].astype(jnp.float32)   # (O, H)
    b_fc = params["b_fc"].astype(jnp.float32)   # (O,)
    H = w_hh.shape[1]
    D = w_ih.shape[1]
    O = w_fc.shape[0]

    def per_gate_cols(w_t, K):
        # w_t: (K, 3H) -> (K, 3*Hp); gate g lives in lanes [g*Hp, g*Hp + H).
        out = jnp.zeros((K, 3 * Hp), jnp.float32)
        for g in range(3):
            out = out.at[:, g * Hp:g * Hp + H].set(w_t[:, g * H:(g + 1) * H])
        return out

    wx = per_gate_cols(w_ih.T, D)                                          # (D, 3Hp)
    wh = jnp.zeros((Hp, 3 * Hp), jnp.float32).at[:H, :].set(per_gate_cols(w_hh.T, H))
    wh_rz = wh[:, 0:2 * Hp]                                                # (Hp, 2Hp)
    wh_n = wh[:, 2 * Hp:3 * Hp]                                            # (Hp, Hp)

    # Folded biases: r/z get b_ih+b_hh, n gets only b_ih (b_hh_n is applied
    # inside r*(...) per PyTorch's GRU formulation).
    bx = jnp.zeros((1, 3 * Hp), jnp.float32)
    bx = bx.at[0, 0 * Hp:0 * Hp + H].set(b_ih[0:H] + b_hh[0:H])
    bx = bx.at[0, 1 * Hp:1 * Hp + H].set(b_ih[H:2 * H] + b_hh[H:2 * H])
    bx = bx.at[0, 2 * Hp:2 * Hp + H].set(b_ih[2 * H:3 * H])
    bhn = jnp.zeros((1, Hp), jnp.float32).at[0, :H].set(b_hh[2 * H:3 * H])

    wfc = jnp.zeros((Hp, Op), jnp.float32).at[:H, :O].set(w_fc.T)
    bfc = jnp.zeros((1, Op), jnp.float32).at[0, :O].set(b_fc)

    bf = jnp.bfloat16
    return (wx.astype(bf), wh_rz.astype(bf), wh_n.astype(bf),
            bx, bhn, wfc.astype(bf), bfc)


def gru_model_forward(x, params):
    """x: (B, T, D) float32 (batch_first, like PyTorch). Returns (B, O)."""
    B, T, D = x.shape
    H = params["w_hh"].shape[1]
    O = params["w_fc"].shape[0]

    Bp = _round_up(max(B, 1), 8)      # full 8-sublane batch tiles
    Hp = _round_up(H, 128)            # lane-aligned gate / hidden width
    Op = _round_up(O, 128)            # lane-dense fc output

    wx, wh_rz, wh_n, bx, bhn, wfc, bfc = pack_params(params, Hp, Op)

    # Pad batch, cast to bf16 (MXU operand), go time-major, flatten (T, Bp) so
    # the whole input projection is a single (T*Bp, D) @ (D, 3Hp) matmul.
    xp = jnp.zeros((Bp, T, D), jnp.bfloat16).at[:B].set(x.astype(jnp.bfloat16))
    x2d = jnp.transpose(xp, (1, 0, 2)).reshape(T * Bp, D)

    full = lambda shape: pl.BlockSpec(shape, lambda i, _s=shape: (0,) * len(_s))

    out_padded = pl.pallas_call(
        gru_fc_kernel,
        out_shape=jax.ShapeDtypeStruct((Bp, Op), jnp.float32),
        grid_spec=pltpu.PrefetchScalarGridSpec(
            num_scalar_prefetch=0,
            grid=(1,),                                   # single invocation; time loop in-kernel
            in_specs=[
                full((T * Bp, D)),                       # all timesteps' inputs (bf16)
                full((D, 3 * Hp)),                       # W_ih^T gate-blocked (bf16)
                full((Hp, 2 * Hp)),                      # W_hh^T r|z block (bf16)
                full((Hp, Hp)),                          # W_hh^T n block (bf16)
                full((1, 3 * Hp)),                       # folded input-side biases (f32)
                full((1, Hp)),                           # b_hh_n (f32)
                full((Hp, Op)),                          # W_fc^T (bf16)
                full((1, Op)),                           # b_fc (f32)
            ],
            out_specs=pl.BlockSpec((Bp, Op), lambda i: (0, 0)),
            scratch_shapes=[pltpu.VMEM((T * Bp, 3 * Hp), jnp.float32)],
        ),
        compiler_params=pltpu.CompilerParams(
            dimension_semantics=("arbitrary",)),
    )(x2d, wx, wh_rz, wh_n, bx, bhn, wfc, bfc)

    return out_padded[:B, :O]


def gru_model_ref(x, params):
    """Pure-JAX f32 reference matching torch.nn.GRU(batch_first=True) + Linear."""
    B, T, D = x.shape
    H = params["w_hh"].shape[1]
    x_tm = jnp.transpose(x.astype(jnp.float32), (1, 0, 2))
    w_ih_T = params["w_ih"].T
    w_hh_T = params["w_hh"].T

    def step(h, x_t):
        gi = x_t @ w_ih_T + params["b_ih"]
        gh = h @ w_hh_T + params["b_hh"]
        r = jax.nn.sigmoid(gi[:, 0:H] + gh[:, 0:H])
        z = jax.nn.sigmoid(gi[:, H:2 * H] + gh[:, H:2 * H])
        n = jnp.tanh(gi[:, 2 * H:3 * H] + r * gh[:, 2 * H:3 * H])
        return (1.0 - z) * n + z * h, None

    h0 = jnp.zeros((B, H), jnp.float32)
    hT, _ = lax.scan(step, h0, x_tm)
    return hT @ params["w_fc"].T + params["b_fc"]


def init_params(key, input_size, hidden_size, output_size):
    """Deterministic init mimicking PyTorch's U(-1/sqrt(H), 1/sqrt(H)); canonical
    PyTorch layout (gate order r, z, n along the 3H axis)."""
    ks = jax.random.split(key, 6)
    bound = 1.0 / np.sqrt(hidden_size)
    u = lambda k, shape: jax.random.uniform(k, shape, jnp.float32, -bound, bound)
    H, D, O = hidden_size, input_size, output_size
    return {
        "w_ih": u(ks[0], (3 * H, D)),
        "w_hh": u(ks[1], (3 * H, H)),
        "b_ih": u(ks[2], (3 * H,)),
        "b_hh": u(ks[3], (3 * H,)),
        "w_fc": u(ks[4], (O, H)),
        "b_fc": u(ks[5], (O,)),
    }


if __name__ == "__main__":
    # Small shapes consistent with the module's forward: x is (batch, seq, features).
    B, T, D = 2, 8, 16
    H, O = 50, 6          # hidden_size=50 (as in the module), output_size=6

    key = jax.random.PRNGKey(0)
    kx, kp = jax.random.split(key)
    x = jax.random.normal(kx, (B, T, D), jnp.float32)
    params = init_params(kp, D, H, O)

    out = gru_model_forward(x, params)
    out = jax.block_until_ready(out)

    ref = gru_model_ref(x, params)
    # bf16 MXU operands (f32 accumulate / f32 h carry) -> loosened tolerance.
    np.testing.assert_allclose(np.asarray(out), np.asarray(ref), rtol=2e-2, atol=2e-2)

    print("KERNEL_OK")
</pallas_src>

<mosaic_0001>
module attributes {stable_mosaic.version = 11 : i64} {
  func.func @gru_fc_kernel(%arg0: i32, %arg1: memref<64x16xbf16, #tpu.memory_space<vmem>>, %arg2: memref<16x384xbf16, #tpu.memory_space<vmem>>, %arg3: memref<128x256xbf16, #tpu.memory_space<vmem>>, %arg4: memref<128x128xbf16, #tpu.memory_space<vmem>>, %arg5: memref<1x384xf32, #tpu.memory_space<vmem>>, %arg6: memref<1x128xf32, #tpu.memory_space<vmem>>, %arg7: memref<128x128xbf16, #tpu.memory_space<vmem>>, %arg8: memref<1x128xf32, #tpu.memory_space<vmem>>, %arg9: memref<8x128xf32, #tpu.memory_space<vmem>>, %arg10: memref<64x384xf32, #tpu.memory_space<vmem>>) attributes {dimension_semantics = [#tpu.dimension_semantics<arbitrary>], iteration_bounds = array<i64: 1>, scalar_prefetch = 0 : i64, scratch_operands = 1 : i64, tpu.core_type = #tpu.core_type<tc>, window_params = [{pipeline_mode = #tpu.pipeline_mode<synchronous>, transform_indices = @transform_0, window_bounds = array<i64: 64, 16>}, {pipeline_mode = #tpu.pipeline_mode<synchronous>, transform_indices = @transform_1, window_bounds = array<i64: 16, 384>}, {pipeline_mode = #tpu.pipeline_mode<synchronous>, transform_indices = @transform_2, window_bounds = array<i64: 128, 256>}, {pipeline_mode = #tpu.pipeline_mode<synchronous>, transform_indices = @transform_3, window_bounds = array<i64: 128, 128>}, {pipeline_mode = #tpu.pipeline_mode<synchronous>, transform_indices = @transform_4, window_bounds = array<i64: 1, 384>}, {pipeline_mode = #tpu.pipeline_mode<synchronous>, transform_indices = @transform_5, window_bounds = array<i64: 1, 128>}, {pipeline_mode = #tpu.pipeline_mode<synchronous>, transform_indices = @transform_6, window_bounds = array<i64: 128, 128>}, {pipeline_mode = #tpu.pipeline_mode<synchronous>, transform_indices = @transform_7, window_bounds = array<i64: 1, 128>}, {pipeline_mode = #tpu.pipeline_mode<synchronous>, transform_indices = @transform_8, window_bounds = array<i64: 8, 128>}]} {
    %c0 = arith.constant 0 : index
    %c0_0 = arith.constant 0 : index
    %0 = vector.load %arg1[%c0, %c0_0] : memref<64x16xbf16, #tpu.memory_space<vmem>>, vector<64x16xbf16>
    %c0_1 = arith.constant 0 : index
    %c0_2 = arith.constant 0 : index
    %1 = vector.load %arg2[%c0_1, %c0_2] : memref<16x384xbf16, #tpu.memory_space<vmem>>, vector<16x384xbf16>
    %cst = arith.constant dense<0.000000e+00> : vector<64x384xf32>
    %2 = tpu.matmul %0, %1, %cst {dimension_numbers = #tpu.dot_dimension_numbers<[1], [0], [0], [1], [0, 0, 1, 1], [], []>} : vector<64x16xbf16>, vector<16x384xbf16>, vector<64x384xf32> -> vector<64x384xf32>
    %c0_3 = arith.constant 0 : index
    %c0_4 = arith.constant 0 : index
    %3 = vector.load %arg5[%c0_3, %c0_4] : memref<1x384xf32, #tpu.memory_space<vmem>>, vector<1x384xf32>
    %4 = vector.broadcast %3 : vector<1x384xf32> to vector<64x384xf32>
    %5 = arith.addf %2, %4 : vector<64x384xf32>
    %c0_5 = arith.constant 0 : index
    %c0_6 = arith.constant 0 : index
    %6 = vector.load %arg10[%c0_5, %c0_6] : memref<64x384xf32, #tpu.memory_space<vmem>>, vector<64x384xf32>
    tpu.vector_store %arg10[%c0_5, %c0_6], %5 {strides = array<i32>} : memref<64x384xf32, #tpu.memory_space<vmem>>, vector<64x384xf32>,
    %c0_7 = arith.constant 0 : index
    %c0_8 = arith.constant 0 : index
    %7 = vector.load %arg6[%c0_7, %c0_8] : memref<1x128xf32, #tpu.memory_space<vmem>>, vector<1x128xf32>
    %8 = vector.shape_cast %7 : vector<1x128xf32> to vector<1x128xf32>
    %9 = vector.broadcast %8 : vector<1x128xf32> to vector<8x128xf32>
    %cst_9 = arith.constant 0.000000e+00 : f32
    %10 = vector.broadcast %cst_9 : f32 to vector<8x128xf32>
    %c0_i32 = arith.constant 0 : i32
    %c8_i32 = arith.constant 8 : i32
    %11 = arith.muli %c0_i32, %c8_i32 : i32
    %12 = tpu.assume_multiple %11, 8 : i32
    %13 = arith.index_cast %12 : i32 to index
    %c0_10 = arith.constant 0 : index
    %14 = vector.load %arg10[%13, %c0_10] : memref<64x384xf32, #tpu.memory_space<vmem>>, vector<8x384xf32>
    %15 = arith.truncf %10 : vector<8x128xf32> to vector<8x128xbf16>
    %c0_11 = arith.constant 0 : index
    %c0_12 = arith.constant 0 : index
    %16 = vector.load %arg3[%c0_11, %c0_12] : memref<128x256xbf16, #tpu.memory_space<vmem>>, vector<128x256xbf16>
    %cst_13 = arith.constant dense<0.000000e+00> : vector<8x256xf32>
    %17 = tpu.matmul %15, %16, %cst_13 {dimension_numbers = #tpu.dot_dimension_numbers<[1], [0], [0], [1], [0, 0, 1, 1], [], []>} : vector<8x128xbf16>, vector<128x256xbf16>, vector<8x256xf32> -> vector<8x256xf32>
    %c0_14 = arith.constant 0 : index
    %c0_15 = arith.constant 0 : index
    %18 = vector.load %arg4[%c0_14, %c0_15] : memref<128x128xbf16, #tpu.memory_space<vmem>>, vector<128x128xbf16>
    %cst_16 = arith.constant dense<0.000000e+00> : vector<8x128xf32>
    %19 = tpu.matmul %15, %18, %cst_16 {dimension_numbers = #tpu.dot_dimension_numbers<[1], [0], [0], [1], [0, 0, 1, 1], [], []>} : vector<8x128xbf16>, vector<128x128xbf16>, vector<8x128xf32> -> vector<8x128xf32>
    %20 = vector.extract_strided_slice %14 {offsets = [0, 0], sizes = [8, 128], strides = [1, 1]} : vector<8x384xf32> to vector<8x128xf32>
    %21 = vector.extract_strided_slice %17 {offsets = [0, 0], sizes = [8, 128], strides = [1, 1]} : vector<8x256xf32> to vector<8x128xf32>
    %22 = arith.addf %20, %21 : vector<8x128xf32>
    %23 = arith.negf %22 : vector<8x128xf32>
    %24 = math.exp %23 : vector<8x128xf32>
    %cst_17 = arith.constant 1.000000e+00 : f32
    %25 = vector.broadcast %cst_17 : f32 to vector<8x128xf32>
    %26 = arith.addf %25, %24 : vector<8x128xf32>
    %27 = arith.divf %25, %26 : vector<8x128xf32>
    %28 = vector.extract_strided_slice %14 {offsets = [0, 128], sizes = [8, 128], strides = [1, 1]} : vector<8x384xf32> to vector<8x128xf32>
    %29 = vector.extract_strided_slice %17 {offsets = [0, 128], sizes = [8, 128], strides = [1, 1]} : vector<8x256xf32> to vector<8x128xf32>
    %30 = arith.addf %28, %29 : vector<8x128xf32>
    %31 = arith.negf %30 : vector<8x128xf32>
    %32 = math.exp %31 : vector<8x128xf32>
    %cst_18 = arith.constant 1.000000e+00 : f32
    %33 = vector.broadcast %cst_18 : f32 to vector<8x128xf32>
    %34 = arith.addf %33, %32 : vector<8x128xf32>
    %35 = arith.divf %33, %34 : vector<8x128xf32>
    %36 = vector.extract_strided_slice %14 {offsets = [0, 256], sizes = [8, 128], strides = [1, 1]} : vector<8x384xf32> to vector<8x128xf32>
    %37 = arith.addf %19, %9 : vector<8x128xf32>
    %38 = arith.mulf %27, %37 : vector<8x128xf32>
    %39 = arith.addf %36, %38 : vector<8x128xf32>
    %40 = math.tanh %39 : vector<8x128xf32>
    %cst_19 = arith.constant 1.000000e+00 : f32
    %41 = vector.broadcast %cst_19 : f32 to vector<8x128xf32>
    %42 = arith.subf %41, %35 : vector<8x128xf32>
    %43 = arith.mulf %42, %40 : vector<8x128xf32>
    %44 = arith.mulf %35, %10 : vector<8x128xf32>
    %45 = arith.addf %43, %44 : vector<8x128xf32>
    %c1_i32 = arith.constant 1 : i32
    %c8_i32_20 = arith.constant 8 : i32
    %46 = arith.muli %c1_i32, %c8_i32_20 : i32
    %47 = tpu.assume_multiple %46, 8 : i32
    %48 = arith.index_cast %47 : i32 to index
    %c0_21 = arith.constant 0 : index
    %49 = vector.load %arg10[%48, %c0_21] : memref<64x384xf32, #tpu.memory_space<vmem>>, vector<8x384xf32>
    %50 = arith.truncf %45 : vector<8x128xf32> to vector<8x128xbf16>
    %c0_22 = arith.constant 0 : index
    %c0_23 = arith.constant 0 : index
    %51 = vector.load %arg3[%c0_22, %c0_23] : memref<128x256xbf16, #tpu.memory_space<vmem>>, vector<128x256xbf16>
    %cst_24 = arith.constant dense<0.000000e+00> : vector<8x256xf32>
    %52 = tpu.matmul %50, %51, %cst_24 {dimension_numbers = #tpu.dot_dimension_numbers<[1], [0], [0], [1], [0, 0, 1, 1], [], []>} : vector<8x128xbf16>, vector<128x256xbf16>, vector<8x256xf32> -> vector<8x256xf32>
    %c0_25 = arith.constant 0 : index
    %c0_26 = arith.constant 0 : index
    %53 = vector.load %arg4[%c0_25, %c0_26] : memref<128x128xbf16, #tpu.memory_space<vmem>>, vector<128x128xbf16>
    %cst_27 = arith.constant dense<0.000000e+00> : vector<8x128xf32>
    %54 = tpu.matmul %50, %53, %cst_27 {dimension_numbers = #tpu.dot_dimension_numbers<[1], [0], [0], [1], [0, 0, 1, 1], [], []>} : vector<8x128xbf16>, vector<128x128xbf16>, vector<8x128xf32> -> vector<8x128xf32>
    %55 = vector.extract_strided_slice %49 {offsets = [0, 0], sizes = [8, 128], strides = [1, 1]} : vector<8x384xf32> to vector<8x128xf32>
    %56 = vector.extract_strided_slice %52 {offsets = [0, 0], sizes = [8, 128], strides = [1, 1]} : vector<8x256xf32> to vector<8x128xf32>
    %57 = arith.addf %55, %56 : vector<8x128xf32>
    %58 = arith.negf %57 : vector<8x128xf32>
    %59 = math.exp %58 : vector<8x128xf32>
    %cst_28 = arith.constant 1.000000e+00 : f32
    %60 = vector.broadcast %cst_28 : f32 to vector<8x128xf32>
    %61 = arith.addf %60, %59 : vector<8x128xf32>
    %62 = arith.divf %60, %61 : vector<8x128xf32>
    %63 = vector.extract_strided_slice %49 {offsets = [0, 128], sizes = [8, 128], strides = [1, 1]} : vector<8x384xf32> to vector<8x128xf32>
    %64 = vector.extract_strided_slice %52 {offsets = [0, 128], sizes = [8, 128], strides = [1, 1]} : vector<8x256xf32> to vector<8x128xf32>
    %65 = arith.addf %63, %64 : vector<8x128xf32>
    %66 = arith.negf %65 : vector<8x128xf32>
    %67 = math.exp %66 : vector<8x128xf32>
    %cst_29 = arith.constant 1.000000e+00 : f32
    %68 = vector.broadcast %cst_29 : f32 to vector<8x128xf32>
    %69 = arith.addf %68, %67 : vector<8x128xf32>
    %70 = arith.divf %68, %69 : vector<8x128xf32>
    %71 = vector.extract_strided_slice %49 {offsets = [0, 256], sizes = [8, 128], strides = [1, 1]} : vector<8x384xf32> to vector<8x128xf32>
    %72 = arith.addf %54, %9 : vector<8x128xf32>
    %73 = arith.mulf %62, %72 : vector<8x128xf32>
    %74 = arith.addf %71, %73 : vector<8x128xf32>
    %75 = math.tanh %74 : vector<8x128xf32>
    %cst_30 = arith.constant 1.000000e+00 : f32
    %76 = vector.broadcast %cst_30 : f32 to vector<8x128xf32>
    %77 = arith.subf %76, %70 : vector<8x128xf32>
    %78 = arith.mulf %77, %75 : vector<8x128xf32>
    %79 = arith.mulf %70, %45 : vector<8x128xf32>
    %80 = arith.addf %78, %79 : vector<8x128xf32>
    %c2_i32 = arith.constant 2 : i32
    %c8_i32_31 = arith.constant 8 : i32
    %81 = arith.muli %c2_i32, %c8_i32_31 : i32
    %82 = tpu.assume_multiple %81, 8 : i32
    %83 = arith.index_cast %82 : i32 to index
    %c0_32 = arith.constant 0 : index
    %84 = vector.load %arg10[%83, %c0_32] : memref<64x384xf32, #tpu.memory_space<vmem>>, vector<8x384xf32>
    %85 = arith.truncf %80 : vector<8x128xf32> to vector<8x128xbf16>
    %c0_33 = arith.constant 0 : index
    %c0_34 = arith.constant 0 : index
    %86 = vector.load %arg3[%c0_33, %c0_34] : memref<128x256xbf16, #tpu.memory_space<vmem>>, vector<128x256xbf16>
    %cst_35 = arith.constant dense<0.000000e+00> : vector<8x256xf32>
    %87 = tpu.matmul %85, %86, %cst_35 {dimension_numbers = #tpu.dot_dimension_numbers<[1], [0], [0], [1], [0, 0, 1, 1], [], []>} : vector<8x128xbf16>, vector<128x256xbf16>, vector<8x256xf32> -> vector<8x256xf32>
    %c0_36 = arith.constant 0 : index
    %c0_37 = arith.constant 0 : index
    %88 = vector.load %arg4[%c0_36, %c0_37] : memref<128x128xbf16, #tpu.memory_space<vmem>>, vector<128x128xbf16>
    %cst_38 = arith.constant dense<0.000000e+00> : vector<8x128xf32>
    %89 = tpu.matmul %85, %88, %cst_38 {dimension_numbers = #tpu.dot_dimension_numbers<[1], [0], [0], [1], [0, 0, 1, 1], [], []>} : vector<8x128xbf16>, vector<128x128xbf16>, vector<8x128xf32> -> vector<8x128xf32>
    %90 = vector.extract_strided_slice %84 {offsets = [0, 0], sizes = [8, 128], strides = [1, 1]} : vector<8x384xf32> to vector<8x128xf32>
    %91 = vector.extract_strided_slice %87 {offsets = [0, 0], sizes = [8, 128], strides = [1, 1]} : vector<8x256xf32> to vector<8x128xf32>
    %92 = arith.addf %90, %91 : vector<8x128xf32>
    %93 = arith.negf %92 : vector<8x128xf32>
    %94 = math.exp %93 : vector<8x128xf32>
    %cst_39 = arith.constant 1.000000e+00 : f32
    %95 = vector.broadcast %cst_39 : f32 to vector<8x128xf32>
    %96 = arith.addf %95, %94 : vector<8x128xf32>
    %97 = arith.divf %95, %96 : vector<8x128xf32>
    %98 = vector.extract_strided_slice %84 {offsets = [0, 128], sizes = [8, 128], strides = [1, 1]} : vector<8x384xf32> to vector<8x128xf32>
    %99 = vector.extract_strided_slice %87 {offsets = [0, 128], sizes = [8, 128], strides = [1, 1]} : vector<8x256xf32> to vector<8x128xf32>
    %100 = arith.addf %98, %99 : vector<8x128xf32>
    %101 = arith.negf %100 : vector<8x128xf32>
    %102 = math.exp %101 : vector<8x128xf32>
    %cst_40 = arith.constant 1.000000e+00 : f32
    %103 = vector.broadcast %cst_40 : f32 to vector<8x128xf32>
    %104 = arith.addf %103, %102 : vector<8x128xf32>
    %105 = arith.divf %103, %104 : vector<8x128xf32>
    %106 = vector.extract_strided_slice %84 {offsets = [0, 256], sizes = [8, 128], strides = [1, 1]} : vector<8x384xf32> to vector<8x128xf32>
    %107 = arith.addf %89, %9 : vector<8x128xf32>
    %108 = arith.mulf %97, %107 : vector<8x128xf32>
    %109 = arith.addf %106, %108 : vector<8x128xf32>
    %110 = math.tanh %109 : vector<8x128xf32>
    %cst_41 = arith.constant 1.000000e+00 : f32
    %111 = vector.broadcast %cst_41 : f32 to vector<8x128xf32>
    %112 = arith.subf %111, %105 : vector<8x128xf32>
    %113 = arith.mulf %112, %110 : vector<8x128xf32>
    %114 = arith.mulf %105, %80 : vector<8x128xf32>
    %115 = arith.addf %113, %114 : vector<8x128xf32>
    %c3_i32 = arith.constant 3 : i32
    %c8_i32_42 = arith.constant 8 : i32
    %116 = arith.muli %c3_i32, %c8_i32_42 : i32
    %117 = tpu.assume_multiple %116, 8 : i32
    %118 = arith.index_cast %117 : i32 to index
    %c0_43 = arith.constant 0 : index
    %119 = vector.load %arg10[%118, %c0_43] : memref<64x384xf32, #tpu.memory_space<vmem>>, vector<8x384xf32>
    %120 = arith.truncf %115 : vector<8x128xf32> to vector<8x128xbf16>
    %c0_44 = arith.constant 0 : index
    %c0_45 = arith.constant 0 : index
    %121 = vector.load %arg3[%c0_44, %c0_45] : memref<128x256xbf16, #tpu.memory_space<vmem>>, vector<128x256xbf16>
    %cst_46 = arith.constant dense<0.000000e+00> : vector<8x256xf32>
    %122 = tpu.matmul %120, %121, %cst_46 {dimension_numbers = #tpu.dot_dimension_numbers<[1], [0], [0], [1], [0, 0, 1, 1], [], []>} : vector<8x128xbf16>, vector<128x256xbf16>, vector<8x256xf32> -> vector<8x256xf32>
    %c0_47 = arith.constant 0 : index
    %c0_48 = arith.constant 0 : index
    %123 = vector.load %arg4[%c0_47, %c0_48] : memref<128x128xbf16, #tpu.memory_space<vmem>>, vector<128x128xbf16>
    %cst_49 = arith.constant dense<0.000000e+00> : vector<8x128xf32>
    %124 = tpu.matmul %120, %123, %cst_49 {dimension_numbers = #tpu.dot_dimension_numbers<[1], [0], [0], [1], [0, 0, 1, 1], [], []>} : vector<8x128xbf16>, vector<128x128xbf16>, vector<8x128xf32> -> vector<8x128xf32>
    %125 = vector.extract_strided_slice %119 {offsets = [0, 0], sizes = [8, 128], strides = [1, 1]} : vector<8x384xf32> to vector<8x128xf32>
    %126 = vector.extract_strided_slice %122 {offsets = [0, 0], sizes = [8, 128], strides = [1, 1]} : vector<8x256xf32> to vector<8x128xf32>
    %127 = arith.addf %125, %126 : vector<8x128xf32>
    %128 = arith.negf %127 : vector<8x128xf32>
    %129 = math.exp %128 : vector<8x128xf32>
    %cst_50 = arith.constant 1.000000e+00 : f32
    %130 = vector.broadcast %cst_50 : f32 to vector<8x128xf32>
    %131 = arith.addf %130, %129 : vector<8x128xf32>
    %132 = arith.divf %130, %131 : vector<8x128xf32>
    %133 = vector.extract_strided_slice %119 {offsets = [0, 128], sizes = [8, 128], strides = [1, 1]} : vector<8x384xf32> to vector<8x128xf32>
    %134 = vector.extract_strided_slice %122 {offsets = [0, 128], sizes = [8, 128], strides = [1, 1]} : vector<8x256xf32> to vector<8x128xf32>
    %135 = arith.addf %133, %134 : vector<8x128xf32>
    %136 = arith.negf %135 : vector<8x128xf32>
    %137 = math.exp %136 : vector<8x128xf32>
    %cst_51 = arith.constant 1.000000e+00 : f32
    %138 = vector.broadcast %cst_51 : f32 to vector<8x128xf32>
    %139 = arith.addf %138, %137 : vector<8x128xf32>
    %140 = arith.divf %138, %139 : vector<8x128xf32>
    %141 = vector.extract_strided_slice %119 {offsets = [0, 256], sizes = [8, 128], strides = [1, 1]} : vector<8x384xf32> to vector<8x128xf32>
    %142 = arith.addf %124, %9 : vector<8x128xf32>
    %143 = arith.mulf %132, %142 : vector<8x128xf32>
    %144 = arith.addf %141, %143 : vector<8x128xf32>
    %145 = math.tanh %144 : vector<8x128xf32>
    %cst_52 = arith.constant 1.000000e+00 : f32
    %146 = vector.broadcast %cst_52 : f32 to vector<8x128xf32>
    %147 = arith.subf %146, %140 : vector<8x128xf32>
    %148 = arith.mulf %147, %145 : vector<8x128xf32>
    %149 = arith.mulf %140, %115 : vector<8x128xf32>
    %150 = arith.addf %148, %149 : vector<8x128xf32>
    %c4_i32 = arith.constant 4 : i32
    %c8_i32_53 = arith.constant 8 : i32
    %151 = arith.muli %c4_i32, %c8_i32_53 : i32
    %152 = tpu.assume_multiple %151, 8 : i32
    %153 = arith.index_cast %152 : i32 to index
    %c0_54 = arith.constant 0 : index
    %154 = vector.load %arg10[%153, %c0_54] : memref<64x384xf32, #tpu.memory_space<vmem>>, vector<8x384xf32>
    %155 = arith.truncf %150 : vector<8x128xf32> to vector<8x128xbf16>
    %c0_55 = arith.constant 0 : index
    %c0_56 = arith.constant 0 : index
    %156 = vector.load %arg3[%c0_55, %c0_56] : memref<128x256xbf16, #tpu.memory_space<vmem>>, vector<128x256xbf16>
    %cst_57 = arith.constant dense<0.000000e+00> : vector<8x256xf32>
    %157 = tpu.matmul %155, %156, %cst_57 {dimension_numbers = #tpu.dot_dimension_numbers<[1], [0], [0], [1], [0, 0, 1, 1], [], []>} : vector<8x128xbf16>, vector<128x256xbf16>, vector<8x256xf32> -> vector<8x256xf32>
    %c0_58 = arith.constant 0 : index
    %c0_59 = arith.constant 0 : index
    %158 = vector.load %arg4[%c0_58, %c0_59] : memref<128x128xbf16, #tpu.memory_space<vmem>>, vector<128x128xbf16>
    %cst_60 = arith.constant dense<0.000000e+00> : vector<8x128xf32>
    %159 = tpu.matmul %155, %158, %cst_60 {dimension_numbers = #tpu.dot_dimension_numbers<[1], [0], [0], [1], [0, 0, 1, 1], [], []>} : vector<8x128xbf16>, vector<128x128xbf16>, vector<8x128xf32> -> vector<8x128xf32>
    %160 = vector.extract_strided_slice %154 {offsets = [0, 0], sizes = [8, 128], strides = [1, 1]} : vector<8x384xf32> to vector<8x128xf32>
    %161 = vector.extract_strided_slice %157 {offsets = [0, 0], sizes = [8, 128], strides = [1, 1]} : vector<8x256xf32> to vector<8x128xf32>
    %162 = arith.addf %160, %161 : vector<8x128xf32>
    %163 = arith.negf %162 : vector<8x128xf32>
    %164 = math.exp %163 : vector<8x128xf32>
    %cst_61 = arith.constant 1.000000e+00 : f32
    %165 = vector.broadcast %cst_61 : f32 to vector<8x128xf32>
    %166 = arith.addf %165, %164 : vector<8x128xf32>
    %167 = arith.divf %165, %166 : vector<8x128xf32>
    %168 = vector.extract_strided_slice %154 {offsets = [0, 128], sizes = [8, 128], strides = [1, 1]} : vector<8x384xf32> to vector<8x128xf32>
    %169 = vector.extract_strided_slice %157 {offsets = [0, 128], sizes = [8, 128], strides = [1, 1]} : vector<8x256xf32> to vector<8x128xf32>
    %170 = arith.addf %168, %169 : vector<8x128xf32>
    %171 = arith.negf %170 : vector<8x128xf32>
    %172 = math.exp %171 : vector<8x128xf32>
    %cst_62 = arith.constant 1.000000e+00 : f32
    %173 = vector.broadcast %cst_62 : f32 to vector<8x128xf32>
    %174 = arith.addf %173, %172 : vector<8x128xf32>
    %175 = arith.divf %173, %174 : vector<8x128xf32>
    %176 = vector.extract_strided_slice %154 {offsets = [0, 256], sizes = [8, 128], strides = [1, 1]} : vector<8x384xf32> to vector<8x128xf32>
    %177 = arith.addf %159, %9 : vector<8x128xf32>
    %178 = arith.mulf %167, %177 : vector<8x128xf32>
    %179 = arith.addf %176, %178 : vector<8x128xf32>
    %180 = math.tanh %179 : vector<8x128xf32>
    %cst_63 = arith.constant 1.000000e+00 : f32
    %181 = vector.broadcast %cst_63 : f32 to vector<8x128xf32>
    %182 = arith.subf %181, %175 : vector<8x128xf32>
    %183 = arith.mulf %182, %180 : vector<8x128xf32>
    %184 = arith.mulf %175, %150 : vector<8x128xf32>
    %185 = arith.addf %183, %184 : vector<8x128xf32>
    %c5_i32 = arith.constant 5 : i32
    %c8_i32_64 = arith.constant 8 : i32
    %186 = arith.muli %c5_i32, %c8_i32_64 : i32
    %187 = tpu.assume_multiple %186, 8 : i32
    %188 = arith.index_cast %187 : i32 to index
    %c0_65 = arith.constant 0 : index
    %189 = vector.load %arg10[%188, %c0_65] : memref<64x384xf32, #tpu.memory_space<vmem>>, vector<8x384xf32>
    %190 = arith.truncf %185 : vector<8x128xf32> to vector<8x128xbf16>
    %c0_66 = arith.constant 0 : index
    %c0_67 = arith.constant 0 : index
    %191 = vector.load %arg3[%c0_66, %c0_67] : memref<128x256xbf16, #tpu.memory_space<vmem>>, vector<128x256xbf16>
    %cst_68 = arith.constant dense<0.000000e+00> : vector<8x256xf32>
    %192 = tpu.matmul %190, %191, %cst_68 {dimension_numbers = #tpu.dot_dimension_numbers<[1], [0], [0], [1], [0, 0, 1, 1], [], []>} : vector<8x128xbf16>, vector<128x256xbf16>, vector<8x256xf32> -> vector<8x256xf32>
    %c0_69 = arith.constant 0 : index
    %c0_70 = arith.constant 0 : index
    %193 = vector.load %arg4[%c0_69, %c0_70] : memref<128x128xbf16, #tpu.memory_space<vmem>>, vector<128x128xbf16>
    %cst_71 = arith.constant dense<0.000000e+00> : vector<8x128xf32>
    %194 = tpu.matmul %190, %193, %cst_71 {dimension_numbers = #tpu.dot_dimension_numbers<[1], [0], [0], [1], [0, 0, 1, 1], [], []>} : vector<8x128xbf16>, vector<128x128xbf16>, vector<8x128xf32> -> vector<8x128xf32>
    %195 = vector.extract_strided_slice %189 {offsets = [0, 0], sizes = [8, 128], strides = [1, 1]} : vector<8x384xf32> to vector<8x128xf32>
    %196 = vector.extract_strided_slice %192 {offsets = [0, 0], sizes = [8, 128], strides = [1, 1]} : vector<8x256xf32> to vector<8x128xf32>
    %197 = arith.addf %195, %196 : vector<8x128xf32>
    %198 = arith.negf %197 : vector<8x128xf32>
    %199 = math.exp %198 : vector<8x128xf32>
    %cst_72 = arith.constant 1.000000e+00 : f32
    %200 = vector.broadcast %cst_72 : f32 to vector<8x128xf32>
    %201 = arith.addf %200, %199 : vector<8x128xf32>
    %202 = arith.divf %200, %201 : vector<8x128xf32>
    %203 = vector.extract_strided_slice %189 {offsets = [0, 128], sizes = [8, 128], strides = [1, 1]} : vector<8x384xf32> to vector<8x128xf32>
    %204 = vector.extract_strided_slice %192 {offsets = [0, 128], sizes = [8, 128], strides = [1, 1]} : vector<8x256xf32> to vector<8x128xf32>
    %205 = arith.addf %203, %204 : vector<8x128xf32>
    %206 = arith.negf %205 : vector<8x128xf32>
    %207 = math.exp %206 : vector<8x128xf32>
    %cst_73 = arith.constant 1.000000e+00 : f32
    %208 = vector.broadcast %cst_73 : f32 to vector<8x128xf32>
    %209 = arith.addf %208, %207 : vector<8x128xf32>
    %210 = arith.divf %208, %209 : vector<8x128xf32>
    %211 = vector.extract_strided_slice %189 {offsets = [0, 256], sizes = [8, 128], strides = [1, 1]} : vector<8x384xf32> to vector<8x128xf32>
    %212 = arith.addf %194, %9 : vector<8x128xf32>
    %213 = arith.mulf %202, %212 : vector<8x128xf32>
    %214 = arith.addf %211, %213 : vector<8x128xf32>
    %215 = math.tanh %214 : vector<8x128xf32>
    %cst_74 = arith.constant 1.000000e+00 : f32
    %216 = vector.broadcast %cst_74 : f32 to vector<8x128xf32>
    %217 = arith.subf %216, %210 : vector<8x128xf32>
    %218 = arith.mulf %217, %215 : vector<8x128xf32>
    %219 = arith.mulf %210, %185 : vector<8x128xf32>
    %220 = arith.addf %218, %219 : vector<8x128xf32>
    %c6_i32 = arith.constant 6 : i32
    %c8_i32_75 = arith.constant 8 : i32
    %221 = arith.muli %c6_i32, %c8_i32_75 : i32
    %222 = tpu.assume_multiple %221, 8 : i32
    %223 = arith.index_cast %222 : i32 to index
    %c0_76 = arith.constant 0 : index
    %224 = vector.load %arg10[%223, %c0_76] : memref<64x384xf32, #tpu.memory_space<vmem>>, vector<8x384xf32>
    %225 = arith.truncf %220 : vector<8x128xf32> to vector<8x128xbf16>
    %c0_77 = arith.constant 0 : index
    %c0_78 = arith.constant 0 : index
    %226 = vector.load %arg3[%c0_77, %c0_78] : memref<128x256xbf16, #tpu.memory_space<vmem>>, vector<128x256xbf16>
    %cst_79 = arith.constant dense<0.000000e+00> : vector<8x256xf32>
    %227 = tpu.matmul %225, %226, %cst_79 {dimension_numbers = #tpu.dot_dimension_numbers<[1], [0], [0], [1], [0, 0, 1, 1], [], []>} : vector<8x128xbf16>, vector<128x256xbf16>, vector<8x256xf32> -> vector<8x256xf32>
    %c0_80 = arith.constant 0 : index
    %c0_81 = arith.constant 0 : index
    %228 = vector.load %arg4[%c0_80, %c0_81] : memref<128x128xbf16, #tpu.memory_space<vmem>>, vector<128x128xbf16>
    %cst_82 = arith.constant dense<0.000000e+00> : vector<8x128xf32>
    %229 = tpu.matmul %225, %228, %cst_82 {dimension_numbers = #tpu.dot_dimension_numbers<[1], [0], [0], [1], [0, 0, 1, 1], [], []>} : vector<8x128xbf16>, vector<128x128xbf16>, vector<8x128xf32> -> vector<8x128xf32>
    %230 = vector.extract_strided_slice %224 {offsets = [0, 0], sizes = [8, 128], strides = [1, 1]} : vector<8x384xf32> to vector<8x128xf32>
    %231 = vector.extract_strided_slice %227 {offsets = [0, 0], sizes = [8, 128], strides = [1, 1]} : vector<8x256xf32> to vector<8x128xf32>
    %232 = arith.addf %230, %231 : vector<8x128xf32>
    %233 = arith.negf %232 : vector<8x128xf32>
    %234 = math.exp %233 : vector<8x128xf32>
    %cst_83 = arith.constant 1.000000e+00 : f32
    %235 = vector.broadcast %cst_83 : f32 to vector<8x128xf32>
    %236 = arith.addf %235, %234 : vector<8x128xf32>
    %237 = arith.divf %235, %236 : vector<8x128xf32>
    %238 = vector.extract_strided_slice %224 {offsets = [0, 128], sizes = [8, 128], strides = [1, 1]} : vector<8x384xf32> to vector<8x128xf32>
    %239 = vector.extract_strided_slice %227 {offsets = [0, 128], sizes = [8, 128], strides = [1, 1]} : vector<8x256xf32> to vector<8x128xf32>
    %240 = arith.addf %238, %239 : vector<8x128xf32>
    %241 = arith.negf %240 : vector<8x128xf32>
    %242 = math.exp %241 : vector<8x128xf32>
    %cst_84 = arith.constant 1.000000e+00 : f32
    %243 = vector.broadcast %cst_84 : f32 to vector<8x128xf32>
    %244 = arith.addf %243, %242 : vector<8x128xf32>
    %245 = arith.divf %243, %244 : vector<8x128xf32>
    %246 = vector.extract_strided_slice %224 {offsets = [0, 256], sizes = [8, 128], strides = [1, 1]} : vector<8x384xf32> to vector<8x128xf32>
    %247 = arith.addf %229, %9 : vector<8x128xf32>
    %248 = arith.mulf %237, %247 : vector<8x128xf32>
    %249 = arith.addf %246, %248 : vector<8x128xf32>
    %250 = math.tanh %249 : vector<8x128xf32>
    %cst_85 = arith.constant 1.000000e+00 : f32
    %251 = vector.broadcast %cst_85 : f32 to vector<8x128xf32>
    %252 = arith.subf %251, %245 : vector<8x128xf32>
    %253 = arith.mulf %252, %250 : vector<8x128xf32>
    %254 = arith.mulf %245, %220 : vector<8x128xf32>
    %255 = arith.addf %253, %254 : vector<8x128xf32>
    %c7_i32 = arith.constant 7 : i32
    %c8_i32_86 = arith.constant 8 : i32
    %256 = arith.muli %c7_i32, %c8_i32_86 : i32
    %257 = tpu.assume_multiple %256, 8 : i32
    %258 = arith.index_cast %257 : i32 to index
    %c0_87 = arith.constant 0 : index
    %259 = vector.load %arg10[%258, %c0_87] : memref<64x384xf32, #tpu.memory_space<vmem>>, vector<8x384xf32>
    %260 = arith.truncf %255 : vector<8x128xf32> to vector<8x128xbf16>
    %c0_88 = arith.constant 0 : index
    %c0_89 = arith.constant 0 : index
    %261 = vector.load %arg3[%c0_88, %c0_89] : memref<128x256xbf16, #tpu.memory_space<vmem>>, vector<128x256xbf16>
    %cst_90 = arith.constant dense<0.000000e+00> : vector<8x256xf32>
    %262 = tpu.matmul %260, %261, %cst_90 {dimension_numbers = #tpu.dot_dimension_numbers<[1], [0], [0], [1], [0, 0, 1, 1], [], []>} : vector<8x128xbf16>, vector<128x256xbf16>, vector<8x256xf32> -> vector<8x256xf32>
    %c0_91 = arith.constant 0 : index
    %c0_92 = arith.constant 0 : index
    %263 = vector.load %arg4[%c0_91, %c0_92] : memref<128x128xbf16, #tpu.memory_space<vmem>>, vector<128x128xbf16>
    %cst_93 = arith.constant dense<0.000000e+00> : vector<8x128xf32>
    %264 = tpu.matmul %260, %263, %cst_93 {dimension_numbers = #tpu.dot_dimension_numbers<[1], [0], [0], [1], [0, 0, 1, 1], [], []>} : vector<8x128xbf16>, vector<128x128xbf16>, vector<8x128xf32> -> vector<8x128xf32>
    %265 = vector.extract_strided_slice %259 {offsets = [0, 0], sizes = [8, 128], strides = [1, 1]} : vector<8x384xf32> to vector<8x128xf32>
    %266 = vector.extract_strided_slice %262 {offsets = [0, 0], sizes = [8, 128], strides = [1, 1]} : vector<8x256xf32> to vector<8x128xf32>
    %267 = arith.addf %265, %266 : vector<8x128xf32>
    %268 = arith.negf %267 : vector<8x128xf32>
    %269 = math.exp %268 : vector<8x128xf32>
    %cst_94 = arith.constant 1.000000e+00 : f32
    %270 = vector.broadcast %cst_94 : f32 to vector<8x128xf32>
    %271 = arith.addf %270, %269 : vector<8x128xf32>
    %272 = arith.divf %270, %271 : vector<8x128xf32>
    %273 = vector.extract_strided_slice %259 {offsets = [0, 128], sizes = [8, 128], strides = [1, 1]} : vector<8x384xf32> to vector<8x128xf32>
    %274 = vector.extract_strided_slice %262 {offsets = [0, 128], sizes = [8, 128], strides = [1, 1]} : vector<8x256xf32> to vector<8x128xf32>
    %275 = arith.addf %273, %274 : vector<8x128xf32>
    %276 = arith.negf %275 : vector<8x128xf32>
    %277 = math.exp %276 : vector<8x128xf32>
    %cst_95 = arith.constant 1.000000e+00 : f32
    %278 = vector.broadcast %cst_95 : f32 to vector<8x128xf32>
    %279 = arith.addf %278, %277 : vector<8x128xf32>
    %280 = arith.divf %278, %279 : vector<8x128xf32>
    %281 = vector.extract_strided_slice %259 {offsets = [0, 256], sizes = [8, 128], strides = [1, 1]} : vector<8x384xf32> to vector<8x128xf32>
    %282 = arith.addf %264, %9 : vector<8x128xf32>
    %283 = arith.mulf %272, %282 : vector<8x128xf32>
    %284 = arith.addf %281, %283 : vector<8x128xf32>
    %285 = math.tanh %284 : vector<8x128xf32>
    %cst_96 = arith.constant 1.000000e+00 : f32
    %286 = vector.broadcast %cst_96 : f32 to vector<8x128xf32>
    %287 = arith.subf %286, %280 : vector<8x128xf32>
    %288 = arith.mulf %287, %285 : vector<8x128xf32>
    %289 = arith.mulf %280, %255 : vector<8x128xf32>
    %290 = arith.addf %288, %289 : vector<8x128xf32>
    %c8_i32_97 = arith.constant 8 : i32
    %291 = arith.truncf %290 : vector<8x128xf32> to vector<8x128xbf16>
    %c0_98 = arith.constant 0 : index
    %c0_99 = arith.constant 0 : index
    %292 = vector.load %arg7[%c0_98, %c0_99] : memref<128x128xbf16, #tpu.memory_space<vmem>>, vector<128x128xbf16>
    %cst_100 = arith.constant dense<0.000000e+00> : vector<8x128xf32>
    %293 = tpu.matmul %291, %292, %cst_100 {dimension_numbers = #tpu.dot_dimension_numbers<[1], [0], [0], [1], [0, 0, 1, 1], [], []>} : vector<8x128xbf16>, vector<128x128xbf16>, vector<8x128xf32> -> vector<8x128xf32>
    %c0_101 = arith.constant 0 : index
    %c0_102 = arith.constant 0 : index
    %294 = vector.load %arg8[%c0_101, %c0_102] : memref<1x128xf32, #tpu.memory_space<vmem>>, vector<1x128xf32>
    %295 = vector.broadcast %294 : vector<1x128xf32> to vector<8x128xf32>
    %296 = arith.addf %293, %295 : vector<8x128xf32>
    %c0_103 = arith.constant 0 : index
    %c0_104 = arith.constant 0 : index
    %297 = vector.load %arg9[%c0_103, %c0_104] : memref<8x128xf32, #tpu.memory_space<vmem>>, vector<8x128xf32>
    tpu.vector_store %arg9[%c0_103, %c0_104], %296 {strides = array<i32>} : memref<8x128xf32, #tpu.memory_space<vmem>>, vector<8x128xf32>,
    return
  }
  func.func @transform_0(%arg0: i32) -> (i32, i32) {
    %c0_i32 = arith.constant 0 : i32
    %c0_i32_0 = arith.constant 0 : i32
    %c0_i32_1 = arith.constant 0 : i32
    return %c0_i32, %c0_i32_0 : i32, i32
  }
  func.func @transform_1(%arg0: i32) -> (i32, i32) {
    %c0_i32 = arith.constant 0 : i32
    %c0_i32_0 = arith.constant 0 : i32
    %c0_i32_1 = arith.constant 0 : i32
    return %c0_i32, %c0_i32_0 : i32, i32
  }
  func.func @transform_2(%arg0: i32) -> (i32, i32) {
    %c0_i32 = arith.constant 0 : i32
    %c0_i32_0 = arith.constant 0 : i32
    %c0_i32_1 = arith.constant 0 : i32
    return %c0_i32, %c0_i32_0 : i32, i32
  }
  func.func @transform_3(%arg0: i32) -> (i32, i32) {
    %c0_i32 = arith.constant 0 : i32
    %c0_i32_0 = arith.constant 0 : i32
    %c0_i32_1 = arith.constant 0 : i32
    return %c0_i32, %c0_i32_0 : i32, i32
  }
  func.func @transform_4(%arg0: i32) -> (i32, i32) {
    %c0_i32 = arith.constant 0 : i32
    %c0_i32_0 = arith.constant 0 : i32
    %c0_i32_1 = arith.constant 0 : i32
    return %c0_i32, %c0_i32_0 : i32, i32
  }
  func.func @transform_5(%arg0: i32) -> (i32, i32) {
    %c0_i32 = arith.constant 0 : i32
    %c0_i32_0 = arith.constant 0 : i32
    %c0_i32_1 = arith.constant 0 : i32
    return %c0_i32, %c0_i32_0 : i32, i32
  }
  func.func @transform_6(%arg0: i32) -> (i32, i32) {
    %c0_i32 = arith.constant 0 : i32
    %c0_i32_0 = arith.constant 0 : i32
    %c0_i32_1 = arith.constant 0 : i32
    return %c0_i32, %c0_i32_0 : i32, i32
  }
  func.func @transform_7(%arg0: i32) -> (i32, i32) {
    %c0_i32 = arith.constant 0 : i32
    %c0_i32_0 = arith.constant 0 : i32
    %c0_i32_1 = arith.constant 0 : i32
    return %c0_i32, %c0_i32_0 : i32, i32
  }
  func.func @transform_8(%arg0: i32) -> (i32, i32) {
    %c0_i32 = arith.constant 0 : i32
    %c0_i32_0 = arith.constant 0 : i32
    %c0_i32_1 = arith.constant 0 : i32
    return %c0_i32, %c0_i32_0 : i32, i32
  }
}

</mosaic_0001>

<llo_original>
// kernel: tpu_custom_call.1
$region0: #{tpu_custom_call.1}
  #allocation0 [shape = 'u32[]', space=smem, size = 0x4, offset = 0x4, fixed_abs, tag = 'smem constant byte address 0x4 - core index']
  #allocation1 [shape = 'u32[72,128]{1,0:T(1,128)}', space=vmem, size = 0x9000, scoped, tag = 'internal scratch']
  #allocation2 [shape = 'f32[64,384]{1,0:T(8,128)}', space=vmem, size = 0x18000, scoped, tag = 'scratch operand']
  %s0 = inlined_call_operand.vmem [shape: bf16[64,16], index: 0, kind: input, shape index: {}]
  %s1 = inlined_call_operand.vmem [shape: bf16[16,384], index: 1, kind: input, shape index: {}]
  %s2 = inlined_call_operand.hbm [shape: bf16[128,256], index: 2, kind: input, shape index: {}]
  %s3 = inlined_call_operand.hbm [shape: bf16[128,128], index: 3, kind: input, shape index: {}]
  %s4 = inlined_call_operand.vmem [shape: f32[1,384], index: 4, kind: input, shape index: {}]
  %s5 = inlined_call_operand.vmem [shape: f32[1,128], index: 5, kind: input, shape index: {}]
  %s6 = inlined_call_operand.hbm [shape: bf16[128,128], index: 6, kind: input, shape index: {}]
  %s7 = inlined_call_operand.vmem [shape: f32[1,128], index: 7, kind: input, shape index: {}]
  %s8 = inlined_call_operand.hbm [shape: f32[8,128], index: 8, kind: output, shape index: {}]
  %s9 = sld [smem:[#allocation0]]
  $region54: #{tpu_custom_call.1} parent=0
    _
  %s11 = ssub.s32 1, %s9
  %s12 = scalar_select 0, %s11, %s9
  $region1: #{tpu_custom_call.1} parent=0
    #allocation3 [shape = 'u8[65536]{0}', space=vmem, size = 0x10000, scoped, tag = 'input window, operand 2, single buffered']
    #allocation4 [shape = 's32[1]{0}', space=sflag, size = 0x4, scoped, tag = 'scoped memory for tpu_custom_call.1']
    #allocation5 [shape = 's32[1]{0}', space=sflag, size = 0x4, scoped, tag = 'scoped memory for tpu_custom_call.1']
    #allocation6 [shape = 'u8[32768]{0}', space=vmem, size = 0x8000, scoped, tag = 'input window, operand 3, single buffered']
    #allocation7 [shape = 's32[1]{0}', space=sflag, size = 0x4, scoped, tag = 'scoped memory for tpu_custom_call.1']
    #allocation8 [shape = 'u8[32768]{0}', space=vmem, size = 0x8000, scoped, tag = 'input window, operand 6, single buffered']
    #allocation9 [shape = 'u8[4096]{0}', space=vmem, size = 0x1000, scoped, tag = 'output window, operand 0, single buffered']
    %13 = vsyncpa [#allocation4], 0
    %14 = vsyncpa [#allocation7], 0
    %15 = vsyncpa [#allocation5], 0
    // Predicated region
    $region2: #{tpu_custom_call.1} parent=1 // pred_check
      _
    $region3: #{tpu_custom_call.1} parent=1 // pred_check_branch
      %17 = sbr.rel (0) target = $region5
    $region4: #{tpu_custom_call.1} parent=1 // pred_region
      _
    $region5: #{tpu_custom_call.1} parent=1 // pred_fallthru
      _
    // Predicated region
    $region6: #{tpu_custom_call.1} parent=1 // pred_check
      _
    $region7: #{tpu_custom_call.1} parent=1 // pred_check_branch
      %19 = sbr.rel (0) target = $region9
    $region8: #{tpu_custom_call.1} parent=1 // pred_region
      _
    $region9: #{tpu_custom_call.1} parent=1 // pred_fallthru
      _
    // Predicated region
    $region10: #{tpu_custom_call.1} parent=1 // pred_check
      _
    $region11: #{tpu_custom_call.1} parent=1 // pred_check_branch
      %21 = sbr.rel (0) target = $region13
    $region12: #{tpu_custom_call.1} parent=1 // pred_region
      %23 = vsyncadd [#allocation4], 0
      %s24 = sshll.u32 %s2, 4
      %s25 = int_to_ptr.hbm [resolvable:$true] %s24
      %s26 = sshll.u32 [#allocation3], 4
      %s27 = int_to_ptr.vmem [resolvable:$true] %s26
      %32 = dma.hbm_to_vmem [thread:$0]  %s25, 2048, %s27, [#allocation4], 128, 128, 8
    $region13: #{tpu_custom_call.1} parent=1 // pred_fallthru
      _
    // Predicated region
    $region14: #{tpu_custom_call.1} parent=1 // pred_check
      _
    $region15: #{tpu_custom_call.1} parent=1 // pred_check_branch
      %34 = sbr.rel (0) target = $region17
    $region16: #{tpu_custom_call.1} parent=1 // pred_region
      %36 = vsyncadd [#allocation7], 0
      %s37 = sshll.u32 %s3, 4
      %s38 = int_to_ptr.hbm [resolvable:$true] %s37
      %s39 = sshll.u32 [#allocation6], 4
      %s40 = int_to_ptr.vmem [resolvable:$true] %s39
      %45 = dma.hbm_to_vmem [thread:$0]  %s38, 1024, %s40, [#allocation7], 64, 64, 4
    $region17: #{tpu_custom_call.1} parent=1 // pred_fallthru
      _
    // Predicated region
    $region18: #{tpu_custom_call.1} parent=1 // pred_check
      _
    $region19: #{tpu_custom_call.1} parent=1 // pred_check_branch
      %47 = sbr.rel (0) target = $region21
    $region20: #{tpu_custom_call.1} parent=1 // pred_region
      _
    $region21: #{tpu_custom_call.1} parent=1 // pred_fallthru
      _
    // Predicated region
    $region22: #{tpu_custom_call.1} parent=1 // pred_check
      _
    $region23: #{tpu_custom_call.1} parent=1 // pred_check_branch
      %49 = sbr.rel (0) target = $region25
    $region24: #{tpu_custom_call.1} parent=1 // pred_region
      _
    $region25: #{tpu_custom_call.1} parent=1 // pred_fallthru
      _
    // Predicated region
    $region26: #{tpu_custom_call.1} parent=1 // pred_check
      _
    $region27: #{tpu_custom_call.1} parent=1 // pred_check_branch
      %51 = sbr.rel (0) target = $region29
    $region28: #{tpu_custom_call.1} parent=1 // pred_region
      %53 = vsyncadd [#allocation7], 0
      %s54 = sshll.u32 %s6, 4
      %s55 = int_to_ptr.hbm [resolvable:$true] %s54
      %s56 = sshll.u32 [#allocation8], 4
      %s57 = int_to_ptr.vmem [resolvable:$true] %s56
      %62 = dma.hbm_to_vmem [thread:$0]  %s55, 1024, %s57, [#allocation7], 64, 64, 4
    $region29: #{tpu_custom_call.1} parent=1 // pred_fallthru
      _
    // Predicated region
    $region30: #{tpu_custom_call.1} parent=1 // pred_check
      _
    $region31: #{tpu_custom_call.1} parent=1 // pred_check_branch
      %64 = sbr.rel (0) target = $region33
    $region32: #{tpu_custom_call.1} parent=1 // pred_region
      _
    $region33: #{tpu_custom_call.1} parent=1 // pred_fallthru
      _
    // Predicated region
    $region34: #{tpu_custom_call.1} parent=1 // pred_check
      _
    $region35: #{tpu_custom_call.1} parent=1 // pred_check_branch
      %66 = sbr.rel (0) target = $region37
    $region36: #{tpu_custom_call.1} parent=1 // pred_region
      %68 = dma.done [#allocation4], 2048
    $region37: #{tpu_custom_call.1} parent=1 // pred_fallthru
      _
    // Predicated region
    $region38: #{tpu_custom_call.1} parent=1 // pred_check
      _
    $region39: #{tpu_custom_call.1} parent=1 // pred_check_branch
      %70 = sbr.rel (0) target = $region41
    $region40: #{tpu_custom_call.1} parent=1 // pred_region
      %72 = dma.done [#allocation7], 1024
    $region41: #{tpu_custom_call.1} parent=1 // pred_fallthru
      _
    // Predicated region
    $region42: #{tpu_custom_call.1} parent=1 // pred_check
      _
    $region43: #{tpu_custom_call.1} parent=1 // pred_check_branch
      %74 = sbr.rel (0) target = $region45
    $region44: #{tpu_custom_call.1} parent=1 // pred_region
      %76 = dma.done [#allocation7], 1024
    $region45: #{tpu_custom_call.1} parent=1 // pred_fallthru
      _
    %v78 = vld [vmem:[%s0] sm:$0xf]
    %v79 = vld [vmem:[%s0 + $0x4] sm:$0xf]
    %v80 = vld [vmem:[%s0 + $0x8] sm:$0xf]
    %v81 = vld [vmem:[%s0 + $0xc] sm:$0xf]
    %v82 = vld [vmem:[%s0 + $0x10] sm:$0xf]
    %v83 = vld [vmem:[%s0 + $0x14] sm:$0xf]
    %v84 = vld [vmem:[%s0 + $0x18] sm:$0xf]
    %v85 = vld [vmem:[%s0 + $0x1c] sm:$0xf]
    %v86 = vld [vmem:[%s1] sm:$0xff]
    %v87 = vld [vmem:[%s1 + $0x8] sm:$0xf]
    %v88 = vld [vmem:[%s1 + $0xc] sm:$0xff]
    %v89 = vld [vmem:[%s1 + $0x14] sm:$0xf]
    %v90 = vld [vmem:[%s4] sm:$0x7]
    %v92 = vperm.slane %v90, 0
    %v93 = vperm.slane %v90, 1
    %v94 = vperm.slane %v90, 2
    %v106 = vunpack.c.l.b16 %v78
    %v107 = vunpack.c.l.b16 %v79
    %v108 = vunpack.c.l.b16 %v80
    %v109 = vunpack.c.l.b16 %v81
    %v110 = vunpack.c.l.b16 %v82
    %v111 = vunpack.c.l.b16 %v83
    %v112 = vunpack.c.l.b16 %v84
    %v113 = vunpack.c.l.b16 %v85
    %v114 = vpack.c.b16 %v107, %v106
    %v115 = vpack.c.b16 %v109, %v108
    %v116 = vpack.c.b16 %v111, %v110
    %v117 = vpack.c.b16 %v113, %v112
    %v122 = vunpack.c.l.b16 %v86
    %v123 = vunpack.c.h.b16 %v86
    %v124 = vunpack.c.l.b16 %v87
    %v125 = vunpack.c.l.b16 %v88
    %v126 = vunpack.c.h.b16 %v88
    %v127 = vunpack.c.l.b16 %v89
    %v128 = vpack.c.b16 %v125, %v122
    %v129 = vpack.c.b16 %v126, %v123
    %v130 = vpack.c.b16 %v127, %v124
    %vm134 = vcmask 130048
    %v136 = vsel %vm134, %v114, 0
    %v139 = vsel %vm134, %v115, 0
    %v142 = vsel %vm134, %v116, 0
    %v145 = vsel %vm134, %v117, 0
    %147 = vmatpush.bf16.msra.mxu0 0
    %148 = vmatpush.bf16.msra.mxu0 0
    %149 = vmatpush.bf16.msra.mxu0 0
    %150 = vmatpush.bf16.msra.mxu0 0
    %151 = vmatpush.bf16.msra.mxu0 0
    %152 = vmatpush.bf16.msra.mxu0 0
    %153 = vmatpush.bf16.msra.mxu0 0
    %154 = vmatpush.bf16.msra.mxu0 %v128
    %155 = vmatmul.bf16.gmra.mxu0 %v136
    %v156 = vpop.f32.mrf.mxu0
    %v157 = vadd.f32 %v92, %v156
    %v158 = vpop.f32.mrf.mxu0
    %v159 = vadd.f32 %v92, %v158
    %160 = vmatmul.bf16.gmra.mxu0 %v139
    %v161 = vpop.f32.mrf.mxu0
    %v162 = vadd.f32 %v92, %v161
    %v163 = vpop.f32.mrf.mxu0
    %v164 = vadd.f32 %v92, %v163
    %165 = vmatmul.bf16.gmra.mxu0 %v142
    %v166 = vpop.f32.mrf.mxu0
    %v167 = vadd.f32 %v92, %v166
    %v168 = vpop.f32.mrf.mxu0
    %v169 = vadd.f32 %v92, %v168
    %170 = vmatmul.bf16.gmra.mxu0 %v145
    %v171 = vpop.f32.mrf.mxu0
    %v172 = vadd.f32 %v92, %v171
    %v173 = vpop.f32.mrf.mxu0
    %v174 = vadd.f32 %v92, %v173
    %175 = vdwg.mxu0
    %176 = vmatpush.bf16.msra.mxu0 0
    %177 = vmatpush.bf16.msra.mxu0 0
    %178 = vmatpush.bf16.msra.mxu0 0
    %179 = vmatpush.bf16.msra.mxu0 0
    %180 = vmatpush.bf16.msra.mxu0 0
    %181 = vmatpush.bf16.msra.mxu0 0
    %182 = vmatpush.bf16.msra.mxu0 0
    %183 = vmatpush.bf16.msra.mxu0 %v129
    %184 = vmatmul.bf16.gmra.mxu0 %v136
    %v185 = vpop.f32.mrf.mxu0
    %v186 = vadd.f32 %v93, %v185
    %v187 = vpop.f32.mrf.mxu0
    %v188 = vadd.f32 %v93, %v187
    %189 = vmatmul.bf16.gmra.mxu0 %v139
    %v190 = vpop.f32.mrf.mxu0
    %v191 = vadd.f32 %v93, %v190
    %v192 = vpop.f32.mrf.mxu0
    %v193 = vadd.f32 %v93, %v192
    %194 = vmatmul.bf16.gmra.mxu0 %v142
    %v195 = vpop.f32.mrf.mxu0
    %v196 = vadd.f32 %v93, %v195
    %v197 = vpop.f32.mrf.mxu0
    %v198 = vadd.f32 %v93, %v197
    %199 = vmatmul.bf16.gmra.mxu0 %v145
    %v200 = vpop.f32.mrf.mxu0
    %v201 = vadd.f32 %v93, %v200
    %v202 = vpop.f32.mrf.mxu0
    %v203 = vadd.f32 %v93, %v202
    %204 = vdwg.mxu0
    %205 = vmatpush.bf16.msra.mxu0 0
    %206 = vmatpush.bf16.msra.mxu0 0
    %207 = vmatpush.bf16.msra.mxu0 0
    %208 = vmatpush.bf16.msra.mxu0 0
    %209 = vmatpush.bf16.msra.mxu0 0
    %210 = vmatpush.bf16.msra.mxu0 0
    %211 = vmatpush.bf16.msra.mxu0 0
    %212 = vmatpush.bf16.msra.mxu0 %v130
    %213 = vmatmul.bf16.gmra.mxu0 %v136
    %v214 = vpop.f32.mrf.mxu0
    %v215 = vadd.f32 %v94, %v214
    %v216 = vpop.f32.mrf.mxu0
    %v217 = vadd.f32 %v94, %v216
    %218 = vmatmul.bf16.gmra.mxu0 %v139
    %v219 = vpop.f32.mrf.mxu0
    %v220 = vadd.f32 %v94, %v219
    %v221 = vpop.f32.mrf.mxu0
    %v222 = vadd.f32 %v94, %v221
    %223 = vmatmul.bf16.gmra.mxu0 %v142
    %v224 = vpop.f32.mrf.mxu0
    %v225 = vadd.f32 %v94, %v224
    %v226 = vpop.f32.mrf.mxu0
    %v227 = vadd.f32 %v94, %v226
    %228 = vmatmul.bf16.gmra.mxu0 %v145
    %v229 = vpop.f32.mrf.mxu0
    %v230 = vadd.f32 %v94, %v229
    %v231 = vpop.f32.mrf.mxu0
    %v232 = vadd.f32 %v94, %v231
    %233 = vdwg.mxu0
    %234 = vst [vmem:[#allocation2] sm:$0xff] %v157
    %235 = vst [vmem:[#allocation2 + $0x8] sm:$0xff] %v186
    %236 = vst [vmem:[#allocation2 + $0x10] sm:$0xff] %v215
    %237 = vst [vmem:[#allocation2 + $0x18] sm:$0xff] %v159
    %238 = vst [vmem:[#allocation2 + $0x20] sm:$0xff] %v188
    %239 = vst [vmem:[#allocation2 + $0x28] sm:$0xff] %v217
    %240 = vst [vmem:[#allocation2 + $0x30] sm:$0xff] %v162
    %241 = vst [vmem:[#allocation2 + $0x38] sm:$0xff] %v191
    %242 = vst [vmem:[#allocation2 + $0x40] sm:$0xff] %v220
    %243 = vst [vmem:[#allocation2 + $0x48] sm:$0xff] %v164
    %244 = vst [vmem:[#allocation2 + $0x50] sm:$0xff] %v193
    %245 = vst [vmem:[#allocation2 + $0x58] sm:$0xff] %v222
    %246 = vst [vmem:[#allocation2 + $0x60] sm:$0xff] %v167
    %247 = vst [vmem:[#allocation2 + $0x68] sm:$0xff] %v196
    %248 = vst [vmem:[#allocation2 + $0x70] sm:$0xff] %v225
    %249 = vst [vmem:[#allocation2 + $0x78] sm:$0xff] %v169
    %250 = vst [vmem:[#allocation2 + $0x80] sm:$0xff] %v198
    %251 = vst [vmem:[#allocation2 + $0x88] sm:$0xff] %v227
    %252 = vst [vmem:[#allocation2 + $0x90] sm:$0xff] %v172
    %253 = vst [vmem:[#allocation2 + $0x98] sm:$0xff] %v201
    %254 = vst [vmem:[#allocation2 + $0xa0] sm:$0xff] %v230
    %255 = vst [vmem:[#allocation2 + $0xa8] sm:$0xff] %v174
    %256 = vst [vmem:[#allocation2 + $0xb0] sm:$0xff] %v203
    %257 = vst [vmem:[#allocation2 + $0xb8] sm:$0xff] %v232
    %v258 = vld [vmem:[%s5] sm:$0x1]
    %v260 = vperm.slane %v258, 0
    %s262 = smul.u32 0, 3
    %s263 = smul.addr %s262, 8
    %s264 = scalar_lea.vmem [#allocation2], %s263
    %v265 = vld [vmem:[%s264] sm:$0xff]
    %v266 = vld [vmem:[%s264 + $0x8] sm:$0xff]
    %v267 = vld [vmem:[%s264 + $0x10] sm:$0xff]
    %v268 = vld [vmem:[#allocation3] sm:$0xff]
    %v269 = vld [vmem:[#allocation3 + $0x8] sm:$0xff]
    %v270 = vld [vmem:[#allocation3 + $0x10] sm:$0xff]
    %v271 = vld [vmem:[#allocation3 + $0x18] sm:$0xff]
    %v272 = vld [vmem:[#allocation3 + $0x20] sm:$0xff]
    %v273 = vld [vmem:[#allocation3 + $0x28] sm:$0xff]
    %v274 = vld [vmem:[#allocation3 + $0x30] sm:$0xff]
    %v275 = vld [vmem:[#allocation3 + $0x38] sm:$0xff]
    %v276 = vld [vmem:[#allocation3 + $0x40] sm:$0xff]
    %v277 = vld [vmem:[#allocation3 + $0x48] sm:$0xff]
    %v278 = vld [vmem:[#allocation3 + $0x50] sm:$0xff]
    %v279 = vld [vmem:[#allocation3 + $0x58] sm:$0xff]
    %v280 = vld [vmem:[#allocation3 + $0x60] sm:$0xff]
    %v281 = vld [vmem:[#allocation3 + $0x68] sm:$0xff]
    %v282 = vld [vmem:[#allocation3 + $0x70] sm:$0xff]
    %v283 = vld [vmem:[#allocation3 + $0x78] sm:$0xff]
    %v300 = vunpack.c.l.b16 %v268
    %v301 = vunpack.c.h.b16 %v268
    %v302 = vunpack.c.l.b16 %v269
    %v303 = vunpack.c.h.b16 %v269
    %v304 = vunpack.c.l.b16 %v270
    %v305 = vunpack.c.h.b16 %v270
    %v306 = vunpack.c.l.b16 %v271
    %v307 = vunpack.c.h.b16 %v271
    %v308 = vunpack.c.l.b16 %v272
    %v309 = vunpack.c.h.b16 %v272
    %v310 = vunpack.c.l.b16 %v273
    %v311 = vunpack.c.h.b16 %v273
    %v312 = vunpack.c.l.b16 %v274
    %v313 = vunpack.c.h.b16 %v274
    %v314 = vunpack.c.l.b16 %v275
    %v315 = vunpack.c.h.b16 %v275
    %v316 = vunpack.c.l.b16 %v276
    %v317 = vunpack.c.h.b16 %v276
    %v318 = vunpack.c.l.b16 %v277
    %v319 = vunpack.c.h.b16 %v277
    %v320 = vunpack.c.l.b16 %v278
    %v321 = vunpack.c.h.b16 %v278
    %v322 = vunpack.c.l.b16 %v279
    %v323 = vunpack.c.h.b16 %v279
    %v324 = vunpack.c.l.b16 %v280
    %v325 = vunpack.c.h.b16 %v280
    %v326 = vunpack.c.l.b16 %v281
    %v327 = vunpack.c.h.b16 %v281
    %v328 = vunpack.c.l.b16 %v282
    %v329 = vunpack.c.h.b16 %v282
    %v330 = vunpack.c.l.b16 %v283
    %v331 = vunpack.c.h.b16 %v283
    %v332 = vpack.c.b16 %v302, %v300
    %v333 = vpack.c.b16 %v303, %v301
    %v334 = vpack.c.b16 %v306, %v304
    %v335 = vpack.c.b16 %v307, %v305
    %v336 = vpack.c.b16 %v310, %v308
    %v337 = vpack.c.b16 %v311, %v309
    %v338 = vpack.c.b16 %v314, %v312
    %v339 = vpack.c.b16 %v315, %v313
    %v340 = vpack.c.b16 %v318, %v316
    %v341 = vpack.c.b16 %v319, %v317
    %v342 = vpack.c.b16 %v322, %v320
    %v343 = vpack.c.b16 %v323, %v321
    %v344 = vpack.c.b16 %v326, %v324
    %v345 = vpack.c.b16 %v327, %v325
    %v346 = vpack.c.b16 %v330, %v328
    %v347 = vpack.c.b16 %v331, %v329
    %364 = vmatpush.bf16.msra.mxu0 %v346
    %365 = vmatpush.bf16.msra.mxu0 %v344
    %366 = vmatpush.bf16.msra.mxu0 %v342
    %367 = vmatpush.bf16.msra.mxu0 %v340
    %368 = vmatpush.bf16.msra.mxu0 %v338
    %369 = vmatpush.bf16.msra.mxu0 %v336
    %370 = vmatpush.bf16.msra.mxu0 %v334
    %371 = vmatpush.bf16.msra.mxu0 %v332
    %372 = vmatmul.bf16.gmra.mxu0 0
    %v373 = vpop.f32.mrf.mxu0
    %v374 = vadd.f32 0.0, %v373
    %v375 = vpop.f32.mrf.mxu0
    %376 = vdwg.mxu0
    %377 = vmatpush.bf16.msra.mxu0 %v347
    %378 = vmatpush.bf16.msra.mxu0 %v345
    %379 = vmatpush.bf16.msra.mxu0 %v343
    %380 = vmatpush.bf16.msra.mxu0 %v341
    %381 = vmatpush.bf16.msra.mxu0 %v339
    %382 = vmatpush.bf16.msra.mxu0 %v337
    %383 = vmatpush.bf16.msra.mxu0 %v335
    %384 = vmatpush.bf16.msra.mxu0 %v333
    %385 = vmatmul.bf16.gmra.mxu0 0
    %v386 = vpop.f32.mrf.mxu0
    %v387 = vadd.f32 0.0, %v386
    %v388 = vpop.f32.mrf.mxu0
    %389 = vdwg.mxu0
    %v390 = vld [vmem:[#allocation6] sm:$0xf]
    %v391 = vld [vmem:[#allocation6 + $0x4] sm:$0xf]
    %v392 = vld [vmem:[#allocation6 + $0x8] sm:$0xf]
    %v393 = vld [vmem:[#allocation6 + $0xc] sm:$0xf]
    %v394 = vld [vmem:[#allocation6 + $0x10] sm:$0xf]
    %v395 = vld [vmem:[#allocation6 + $0x14] sm:$0xf]
    %v396 = vld [vmem:[#allocation6 + $0x18] sm:$0xf]
    %v397 = vld [vmem:[#allocation6 + $0x1c] sm:$0xf]
    %v398 = vld [vmem:[#allocation6 + $0x20] sm:$0xf]
    %v399 = vld [vmem:[#allocation6 + $0x24] sm:$0xf]
    %v400 = vld [vmem:[#allocation6 + $0x28] sm:$0xf]
    %v401 = vld [vmem:[#allocation6 + $0x2c] sm:$0xf]
    %v402 = vld [vmem:[#allocation6 + $0x30] sm:$0xf]
    %v403 = vld [vmem:[#allocation6 + $0x34] sm:$0xf]
    %v404 = vld [vmem:[#allocation6 + $0x38] sm:$0xf]
    %v405 = vld [vmem:[#allocation6 + $0x3c] sm:$0xf]
    %v406 = vadd.f32 %v265, %v374
    %v407 = vxor.u32 %v406, 2147483648
    %v408 = vmul.f32 %v407, 1.442695
    %v409 = vpow.pop %v408
    %v410 = vadd.f32 %v409, 1.0
    %v411 = vrcp.pop %v410
    %v412 = vmul.f32 %v410, %v411
    %v413 = vsub.f32 1.0, %v412
    %v414 = vmul.f32 %v411, %v413
    %v415 = vadd.f32 %v411, %v414
    %vm416 = vweird.f32 %v410
    %vm417 = vweird.f32 %v411
    %vm418 = vmor %vm416, %vm417
    %v419 = vsel %vm418, %v411, %v415
    %v420 = vand.u32 2147483647, %v410
    %vm421 = vcmp.eq.f32.partialorder %v420, 8.507059e+37
    %v422 = vand.u32 %v410, 2147483648
    %v423 = vor.u32 1.1754944e-38, %v422
    %v424 = vsel %vm421, %v423, %v419
    %v425 = vmul.f32 1.0, %v424
    %v426 = vadd.f32 %v266, %v387
    %v427 = vxor.u32 %v426, 2147483648
    %v428 = vmul.f32 %v427, 1.442695
    %v429 = vpow.pop %v428
    %v430 = vadd.f32 %v429, 1.0
    %v431 = vrcp.pop %v430
    %v432 = vmul.f32 %v430, %v431
    %v433 = vsub.f32 1.0, %v432
    %v434 = vmul.f32 %v431, %v433
    %v435 = vadd.f32 %v431, %v434
    %vm436 = vweird.f32 %v430
    %vm437 = vweird.f32 %v431
    %vm438 = vmor %vm436, %vm437
    %v439 = vsel %vm438, %v431, %v435
    %v440 = vand.u32 2147483647, %v430
    %vm441 = vcmp.eq.f32.partialorder %v440, 8.507059e+37
    %v442 = vand.u32 %v430, 2147483648
    %v443 = vor.u32 1.1754944e-38, %v442
    %v444 = vsel %vm441, %v443, %v439
    %v445 = vmul.f32 1.0, %v444
    %v462 = vunpack.c.l.b16 %v390
    %v463 = vunpack.c.l.b16 %v391
    %v464 = vunpack.c.l.b16 %v392
    %v465 = vunpack.c.l.b16 %v393
    %v466 = vunpack.c.l.b16 %v394
    %v467 = vunpack.c.l.b16 %v395
    %v468 = vunpack.c.l.b16 %v396
    %v469 = vunpack.c.l.b16 %v397
    %v470 = vunpack.c.l.b16 %v398
    %v471 = vunpack.c.l.b16 %v399
    %v472 = vunpack.c.l.b16 %v400
    %v473 = vunpack.c.l.b16 %v401
    %v474 = vunpack.c.l.b16 %v402
    %v475 = vunpack.c.l.b16 %v403
    %v476 = vunpack.c.l.b16 %v404
    %v477 = vunpack.c.l.b16 %v405
    %v478 = vpack.c.b16 %v463, %v462
    %v479 = vpack.c.b16 %v465, %v464
    %v480 = vpack.c.b16 %v467, %v466
    %v481 = vpack.c.b16 %v469, %v468
    %v482 = vpack.c.b16 %v471, %v470
    %v483 = vpack.c.b16 %v473, %v472
    %v484 = vpack.c.b16 %v475, %v474
    %v485 = vpack.c.b16 %v477, %v476
    %494 = vmatpush.bf16.msra.mxu0 %v485
    %495 = vmatpush.bf16.msra.mxu0 %v484
    %496 = vmatpush.bf16.msra.mxu0 %v483
    %497 = vmatpush.bf16.msra.mxu0 %v482
    %498 = vmatpush.bf16.msra.mxu0 %v481
    %499 = vmatpush.bf16.msra.mxu0 %v480
    %500 = vmatpush.bf16.msra.mxu0 %v479
    %501 = vmatpush.bf16.msra.mxu0 %v478
    %502 = vmatmul.bf16.gmra.mxu0 0
    %v503 = vpop.f32.mrf.mxu0
    %v504 = vadd.f32 %v260, %v503
    %v505 = vpop.f32.mrf.mxu0
    %506 = vdwg.mxu0
    %v507 = vmul.f32 %v425, %v504
    %v508 = vadd.f32 %v267, %v507
    %v509 = vtanh.pop %v508
    %v510 = vsub.f32 1.0, %v445
    %v511 = vmul.f32 %v510, %v509
    %v512 = vmul.f32 %v445, 0.0
    %v513 = vadd.f32 %v511, %v512
    %s514 = smul.u32 1, 3
    %s515 = smul.addr %s514, 8
    %s516 = scalar_lea.vmem [#allocation2], %s515
    %v517 = vld [vmem:[%s516] sm:$0xff]
    %v518 = vld [vmem:[%s516 + $0x8] sm:$0xff]
    %v519 = vld [vmem:[%s516 + $0x10] sm:$0xff]
    %v520 = vpack.c.bf16 %v513, %v513
    %521 = vmatpush.bf16.msra.mxu0 %v346
    %522 = vmatpush.bf16.msra.mxu0 %v344
    %523 = vmatpush.bf16.msra.mxu0 %v342
    %524 = vmatpush.bf16.msra.mxu0 %v340
    %525 = vmatpush.bf16.msra.mxu0 %v338
    %526 = vmatpush.bf16.msra.mxu0 %v336
    %527 = vmatpush.bf16.msra.mxu0 %v334
    %528 = vmatpush.bf16.msra.mxu0 %v332
    %529 = vmatmul.bf16.gmra.mxu0 %v520
    %v530 = vpop.f32.mrf.mxu0
    %v531 = vadd.f32 0.0, %v530
    %v532 = vpop.f32.mrf.mxu0
    %533 = vdwg.mxu0
    %534 = vmatpush.bf16.msra.mxu0 %v347
    %535 = vmatpush.bf16.msra.mxu0 %v345
    %536 = vmatpush.bf16.msra.mxu0 %v343
    %537 = vmatpush.bf16.msra.mxu0 %v341
    %538 = vmatpush.bf16.msra.mxu0 %v339
    %539 = vmatpush.bf16.msra.mxu0 %v337
    %540 = vmatpush.bf16.msra.mxu0 %v335
    %541 = vmatpush.bf16.msra.mxu0 %v333
    %542 = vmatmul.bf16.gmra.mxu0 %v520
    %v543 = vpop.f32.mrf.mxu0
    %v544 = vadd.f32 0.0, %v543
    %v545 = vpop.f32.mrf.mxu0
    %546 = vdwg.mxu0
    %v547 = vadd.f32 %v517, %v531
    %v548 = vxor.u32 %v547, 2147483648
    %v549 = vmul.f32 %v548, 1.442695
    %v550 = vpow.pop %v549
    %v551 = vadd.f32 %v550, 1.0
    %v552 = vrcp.pop %v551
    %v553 = vmul.f32 %v551, %v552
    %v554 = vsub.f32 1.0, %v553
    %v555 = vmul.f32 %v552, %v554
    %v556 = vadd.f32 %v552, %v555
    %vm557 = vweird.f32 %v551
    %vm558 = vweird.f32 %v552
    %vm559 = vmor %vm557, %vm558
    %v560 = vsel %vm559, %v552, %v556
    %v561 = vand.u32 2147483647, %v551
    %vm562 = vcmp.eq.f32.partialorder %v561, 8.507059e+37
    %v563 = vand.u32 %v551, 2147483648
    %v564 = vor.u32 1.1754944e-38, %v563
    %v565 = vsel %vm562, %v564, %v560
    %v566 = vmul.f32 1.0, %v565
    %v567 = vadd.f32 %v518, %v544
    %v568 = vxor.u32 %v567, 2147483648
    %v569 = vmul.f32 %v568, 1.442695
    %v570 = vpow.pop %v569
    %v571 = vadd.f32 %v570, 1.0
    %v572 = vrcp.pop %v571
    %v573 = vmul.f32 %v571, %v572
    %v574 = vsub.f32 1.0, %v573
    %v575 = vmul.f32 %v572, %v574
    %v576 = vadd.f32 %v572, %v575
    %vm577 = vweird.f32 %v571
    %vm578 = vweird.f32 %v572
    %vm579 = vmor %vm577, %vm578
    %v580 = vsel %vm579, %v572, %v576
    %v581 = vand.u32 2147483647, %v571
    %vm582 = vcmp.eq.f32.partialorder %v581, 8.507059e+37
    %v583 = vand.u32 %v571, 2147483648
    %v584 = vor.u32 1.1754944e-38, %v583
    %v585 = vsel %vm582, %v584, %v580
    %v586 = vmul.f32 1.0, %v585
    %587 = vmatpush.bf16.msra.mxu0 %v485
    %588 = vmatpush.bf16.msra.mxu0 %v484
    %589 = vmatpush.bf16.msra.mxu0 %v483
    %590 = vmatpush.bf16.msra.mxu0 %v482
    %591 = vmatpush.bf16.msra.mxu0 %v481
    %592 = vmatpush.bf16.msra.mxu0 %v480
    %593 = vmatpush.bf16.msra.mxu0 %v479
    %594 = vmatpush.bf16.msra.mxu0 %v478
    %595 = vmatmul.bf16.gmra.mxu0 %v520
    %v596 = vpop.f32.mrf.mxu0
    %v597 = vadd.f32 %v260, %v596
    %v598 = vpop.f32.mrf.mxu0
    %599 = vdwg.mxu0
    %v600 = vmul.f32 %v566, %v597
    %v601 = vadd.f32 %v519, %v600
    %v602 = vtanh.pop %v601
    %v603 = vsub.f32 1.0, %v586
    %v604 = vmul.f32 %v603, %v602
    %v605 = vmul.f32 %v586, %v513
    %v606 = vadd.f32 %v604, %v605
    %s607 = smul.u32 2, 3
    %s608 = smul.addr %s607, 8
    %s609 = scalar_lea.vmem [#allocation2], %s608
    %v610 = vld [vmem:[%s609] sm:$0xff]
    %v611 = vld [vmem:[%s609 + $0x8] sm:$0xff]
    %v612 = vld [vmem:[%s609 + $0x10] sm:$0xff]
    %v613 = vpack.c.bf16 %v606, %v606
    %614 = vmatpush.bf16.msra.mxu0 %v346
    %615 = vmatpush.bf16.msra.mxu0 %v344
    %616 = vmatpush.bf16.msra.mxu0 %v342
    %617 = vmatpush.bf16.msra.mxu0 %v340
    %618 = vmatpush.bf16.msra.mxu0 %v338
    %619 = vmatpush.bf16.msra.mxu0 %v336
    %620 = vmatpush.bf16.msra.mxu0 %v334
    %621 = vmatpush.bf16.msra.mxu0 %v332
    %622 = vmatmul.bf16.gmra.mxu0 %v613
    %v623 = vpop.f32.mrf.mxu0
    %v624 = vadd.f32 0.0, %v623
    %v625 = vpop.f32.mrf.mxu0
    %626 = vdwg.mxu0
    %627 = vmatpush.bf16.msra.mxu0 %v347
    %628 = vmatpush.bf16.msra.mxu0 %v345
    %629 = vmatpush.bf16.msra.mxu0 %v343
    %630 = vmatpush.bf16.msra.mxu0 %v341
    %631 = vmatpush.bf16.msra.mxu0 %v339
    %632 = vmatpush.bf16.msra.mxu0 %v337
    %633 = vmatpush.bf16.msra.mxu0 %v335
    %634 = vmatpush.bf16.msra.mxu0 %v333
    %635 = vmatmul.bf16.gmra.mxu0 %v613
    %v636 = vpop.f32.mrf.mxu0
    %v637 = vadd.f32 0.0, %v636
    %v638 = vpop.f32.mrf.mxu0
    %639 = vdwg.mxu0
    %v640 = vadd.f32 %v610, %v624
    %v641 = vxor.u32 %v640, 2147483648
    %v642 = vmul.f32 %v641, 1.442695
    %v643 = vpow.pop %v642
    %v644 = vadd.f32 %v643, 1.0
    %v645 = vrcp.pop %v644
    %v646 = vmul.f32 %v644, %v645
    %v647 = vsub.f32 1.0, %v646
    %v648 = vmul.f32 %v645, %v647
    %v649 = vadd.f32 %v645, %v648
    %vm650 = vweird.f32 %v644
    %vm651 = vweird.f32 %v645
    %vm652 = vmor %vm650, %vm651
    %v653 = vsel %vm652, %v645, %v649
    %v654 = vand.u32 2147483647, %v644
    %vm655 = vcmp.eq.f32.partialorder %v654, 8.507059e+37
    %v656 = vand.u32 %v644, 2147483648
    %v657 = vor.u32 1.1754944e-38, %v656
    %v658 = vsel %vm655, %v657, %v653
    %v659 = vmul.f32 1.0, %v658
    %v660 = vadd.f32 %v611, %v637
    %v661 = vxor.u32 %v660, 2147483648
    %v662 = vmul.f32 %v661, 1.442695
    %v663 = vpow.pop %v662
    %v664 = vadd.f32 %v663, 1.0
    %v665 = vrcp.pop %v664
    %v666 = vmul.f32 %v664, %v665
    %v667 = vsub.f32 1.0, %v666
    %v668 = vmul.f32 %v665, %v667
    %v669 = vadd.f32 %v665, %v668
    %vm670 = vweird.f32 %v664
    %vm671 = vweird.f32 %v665
    %vm672 = vmor %vm670, %vm671
    %v673 = vsel %vm672, %v665, %v669
    %v674 = vand.u32 2147483647, %v664
    %vm675 = vcmp.eq.f32.partialorder %v674, 8.507059e+37
    %v676 = vand.u32 %v664, 2147483648
    %v677 = vor.u32 1.1754944e-38, %v676
    %v678 = vsel %vm675, %v677, %v673
    %v679 = vmul.f32 1.0, %v678
    %680 = vmatpush.bf16.msra.mxu0 %v485
    %681 = vmatpush.bf16.msra.mxu0 %v484
    %682 = vmatpush.bf16.msra.mxu0 %v483
    %683 = vmatpush.bf16.msra.mxu0 %v482
    %684 = vmatpush.bf16.msra.mxu0 %v481
    %685 = vmatpush.bf16.msra.mxu0 %v480
    %686 = vmatpush.bf16.msra.mxu0 %v479
    %687 = vmatpush.bf16.msra.mxu0 %v478
    %688 = vmatmul.bf16.gmra.mxu0 %v613
    %v689 = vpop.f32.mrf.mxu0
    %v690 = vadd.f32 %v260, %v689
    %v691 = vpop.f32.mrf.mxu0
    %692 = vdwg.mxu0
    %v693 = vmul.f32 %v659, %v690
    %v694 = vadd.f32 %v612, %v693
    %v695 = vtanh.pop %v694
    %v696 = vsub.f32 1.0, %v679
    %v697 = vmul.f32 %v696, %v695
    %v698 = vmul.f32 %v679, %v606
    %v699 = vadd.f32 %v697, %v698
    %s700 = smul.u32 3, 3
    %s701 = smul.addr %s700, 8
    %s702 = scalar_lea.vmem [#allocation2], %s701
    %v703 = vld [vmem:[%s702] sm:$0xff]
    %v704 = vld [vmem:[%s702 + $0x8] sm:$0xff]
    %v705 = vld [vmem:[%s702 + $0x10] sm:$0xff]
    %v706 = vpack.c.bf16 %v699, %v699
    %707 = vmatpush.bf16.msra.mxu0 %v346
    %708 = vmatpush.bf16.msra.mxu0 %v344
    %709 = vmatpush.bf16.msra.mxu0 %v342
    %710 = vmatpush.bf16.msra.mxu0 %v340
    %711 = vmatpush.bf16.msra.mxu0 %v338
    %712 = vmatpush.bf16.msra.mxu0 %v336
    %713 = vmatpush.bf16.msra.mxu0 %v334
    %714 = vmatpush.bf16.msra.mxu0 %v332
    %715 = vmatmul.bf16.gmra.mxu0 %v706
    %v716 = vpop.f32.mrf.mxu0
    %v717 = vadd.f32 0.0, %v716
    %v718 = vpop.f32.mrf.mxu0
    %719 = vdwg.mxu0
    %720 = vmatpush.bf16.msra.mxu0 %v347
    %721 = vmatpush.bf16.msra.mxu0 %v345
    %722 = vmatpush.bf16.msra.mxu0 %v343
    %723 = vmatpush.bf16.msra.mxu0 %v341
    %724 = vmatpush.bf16.msra.mxu0 %v339
    %725 = vmatpush.bf16.msra.mxu0 %v337
    %726 = vmatpush.bf16.msra.mxu0 %v335
    %727 = vmatpush.bf16.msra.mxu0 %v333
    %728 = vmatmul.bf16.gmra.mxu0 %v706
    %v729 = vpop.f32.mrf.mxu0
    %v730 = vadd.f32 0.0, %v729
    %v731 = vpop.f32.mrf.mxu0
    %732 = vdwg.mxu0
    %v733 = vadd.f32 %v703, %v717
    %v734 = vxor.u32 %v733, 2147483648
    %v735 = vmul.f32 %v734, 1.442695
    %v736 = vpow.pop %v735
    %v737 = vadd.f32 %v736, 1.0
    %v738 = vrcp.pop %v737
    %v739 = vmul.f32 %v737, %v738
    %v740 = vsub.f32 1.0, %v739
    %v741 = vmul.f32 %v738, %v740
    %v742 = vadd.f32 %v738, %v741
    %vm743 = vweird.f32 %v737
    %vm744 = vweird.f32 %v738
    %vm745 = vmor %vm743, %vm744
    %v746 = vsel %vm745, %v738, %v742
    %v747 = vand.u32 2147483647, %v737
    %vm748 = vcmp.eq.f32.partialorder %v747, 8.507059e+37
    %v749 = vand.u32 %v737, 2147483648
    %v750 = vor.u32 1.1754944e-38, %v749
    %v751 = vsel %vm748, %v750, %v746
    %v752 = vmul.f32 1.0, %v751
    %v753 = vadd.f32 %v704, %v730
    %v754 = vxor.u32 %v753, 2147483648
    %v755 = vmul.f32 %v754, 1.442695
    %v756 = vpow.pop %v755
    %v757 = vadd.f32 %v756, 1.0
    %v758 = vrcp.pop %v757
    %v759 = vmul.f32 %v757, %v758
    %v760 = vsub.f32 1.0, %v759
    %v761 = vmul.f32 %v758, %v760
    %v762 = vadd.f32 %v758, %v761
    %vm763 = vweird.f32 %v757
    %vm764 = vweird.f32 %v758
    %vm765 = vmor %vm763, %vm764
    %v766 = vsel %vm765, %v758, %v762
    %v767 = vand.u32 2147483647, %v757
    %vm768 = vcmp.eq.f32.partialorder %v767, 8.507059e+37
    %v769 = vand.u32 %v757, 2147483648
    %v770 = vor.u32 1.1754944e-38, %v769
    %v771 = vsel %vm768, %v770, %v766
    %v772 = vmul.f32 1.0, %v771
    %773 = vmatpush.bf16.msra.mxu0 %v485
    %774 = vmatpush.bf16.msra.mxu0 %v484
    %775 = vmatpush.bf16.msra.mxu0 %v483
    %776 = vmatpush.bf16.msra.mxu0 %v482
    %777 = vmatpush.bf16.msra.mxu0 %v481
    %778 = vmatpush.bf16.msra.mxu0 %v480
    %779 = vmatpush.bf16.msra.mxu0 %v479
    %780 = vmatpush.bf16.msra.mxu0 %v478
    %781 = vmatmul.bf16.gmra.mxu0 %v706
    %v782 = vpop.f32.mrf.mxu0
    %v783 = vadd.f32 %v260, %v782
    %v784 = vpop.f32.mrf.mxu0
    %785 = vdwg.mxu0
    %v786 = vmul.f32 %v752, %v783
    %v787 = vadd.f32 %v705, %v786
    %v788 = vtanh.pop %v787
    %v789 = vsub.f32 1.0, %v772
    %v790 = vmul.f32 %v789, %v788
    %v791 = vmul.f32 %v772, %v699
    %v792 = vadd.f32 %v790, %v791
    %s793 = smul.u32 4, 3
    %s794 = smul.addr %s793, 8
    %s795 = scalar_lea.vmem [#allocation2], %s794
    %v796 = vld [vmem:[%s795] sm:$0xff]
    %v797 = vld [vmem:[%s795 + $0x8] sm:$0xff]
    %v798 = vld [vmem:[%s795 + $0x10] sm:$0xff]
    %v799 = vpack.c.bf16 %v792, %v792
    %800 = vmatpush.bf16.msra.mxu0 %v346
    %801 = vmatpush.bf16.msra.mxu0 %v344
    %802 = vmatpush.bf16.msra.mxu0 %v342
    %803 = vmatpush.bf16.msra.mxu0 %v340
    %804 = vmatpush.bf16.msra.mxu0 %v338
    %805 = vmatpush.bf16.msra.mxu0 %v336
    %806 = vmatpush.bf16.msra.mxu0 %v334
    %807 = vmatpush.bf16.msra.mxu0 %v332
    %808 = vmatmul.bf16.gmra.mxu0 %v799
    %v809 = vpop.f32.mrf.mxu0
    %v810 = vadd.f32 0.0, %v809
    %v811 = vpop.f32.mrf.mxu0
    %812 = vdwg.mxu0
    %813 = vmatpush.bf16.msra.mxu0 %v347
    %814 = vmatpush.bf16.msra.mxu0 %v345
    %815 = vmatpush.bf16.msra.mxu0 %v343
    %816 = vmatpush.bf16.msra.mxu0 %v341
    %817 = vmatpush.bf16.msra.mxu0 %v339
    %818 = vmatpush.bf16.msra.mxu0 %v337
    %819 = vmatpush.bf16.msra.mxu0 %v335
    %820 = vmatpush.bf16.msra.mxu0 %v333
    %821 = vmatmul.bf16.gmra.mxu0 %v799
    %v822 = vpop.f32.mrf.mxu0
    %v823 = vadd.f32 0.0, %v822
    %v824 = vpop.f32.mrf.mxu0
    %825 = vdwg.mxu0
    %v826 = vadd.f32 %v796, %v810
    %v827 = vxor.u32 %v826, 2147483648
    %v828 = vmul.f32 %v827, 1.442695
    %v829 = vpow.pop %v828
    %v830 = vadd.f32 %v829, 1.0
    %v831 = vrcp.pop %v830
    %v832 = vmul.f32 %v830, %v831
    %v833 = vsub.f32 1.0, %v832
    %v834 = vmul.f32 %v831, %v833
    %v835 = vadd.f32 %v831, %v834
    %vm836 = vweird.f32 %v830
    %vm837 = vweird.f32 %v831
    %vm838 = vmor %vm836, %vm837
    %v839 = vsel %vm838, %v831, %v835
    %v840 = vand.u32 2147483647, %v830
    %vm841 = vcmp.eq.f32.partialorder %v840, 8.507059e+37
    %v842 = vand.u32 %v830, 2147483648
    %v843 = vor.u32 1.1754944e-38, %v842
    %v844 = vsel %vm841, %v843, %v839
    %v845 = vmul.f32 1.0, %v844
    %v846 = vadd.f32 %v797, %v823
    %v847 = vxor.u32 %v846, 2147483648
    %v848 = vmul.f32 %v847, 1.442695
    %v849 = vpow.pop %v848
    %v850 = vadd.f32 %v849, 1.0
    %v851 = vrcp.pop %v850
    %v852 = vmul.f32 %v850, %v851
    %v853 = vsub.f32 1.0, %v852
    %v854 = vmul.f32 %v851, %v853
    %v855 = vadd.f32 %v851, %v854
    %vm856 = vweird.f32 %v850
    %vm857 = vweird.f32 %v851
    %vm858 = vmor %vm856, %vm857
    %v859 = vsel %vm858, %v851, %v855
    %v860 = vand.u32 2147483647, %v850
    %vm861 = vcmp.eq.f32.partialorder %v860, 8.507059e+37
    %v862 = vand.u32 %v850, 2147483648
    %v863 = vor.u32 1.1754944e-38, %v862
    %v864 = vsel %vm861, %v863, %v859
    %v865 = vmul.f32 1.0, %v864
    %866 = vmatpush.bf16.msra.mxu0 %v485
    %867 = vmatpush.bf16.msra.mxu0 %v484
    %868 = vmatpush.bf16.msra.mxu0 %v483
    %869 = vmatpush.bf16.msra.mxu0 %v482
    %870 = vmatpush.bf16.msra.mxu0 %v481
    %871 = vmatpush.bf16.msra.mxu0 %v480
    %872 = vmatpush.bf16.msra.mxu0 %v479
    %873 = vmatpush.bf16.msra.mxu0 %v478
    %874 = vmatmul.bf16.gmra.mxu0 %v799
    %v875 = vpop.f32.mrf.mxu0
    %v876 = vadd.f32 %v260, %v875
    %v877 = vpop.f32.mrf.mxu0
    %878 = vdwg.mxu0
    %v879 = vmul.f32 %v845, %v876
    %v880 = vadd.f32 %v798, %v879
    %v881 = vtanh.pop %v880
    %v882 = vsub.f32 1.0, %v865
    %v883 = vmul.f32 %v882, %v881
    %v884 = vmul.f32 %v865, %v792
    %v885 = vadd.f32 %v883, %v884
    %s886 = smul.u32 5, 3
    %s887 = smul.addr %s886, 8
    %s888 = scalar_lea.vmem [#allocation2], %s887
    %v889 = vld [vmem:[%s888] sm:$0xff]
    %v890 = vld [vmem:[%s888 + $0x8] sm:$0xff]
    %v891 = vld [vmem:[%s888 + $0x10] sm:$0xff]
    %v892 = vpack.c.bf16 %v885, %v885
    %893 = vmatpush.bf16.msra.mxu0 %v346
    %894 = vmatpush.bf16.msra.mxu0 %v344
    %895 = vmatpush.bf16.msra.mxu0 %v342
    %896 = vmatpush.bf16.msra.mxu0 %v340
    %897 = vmatpush.bf16.msra.mxu0 %v338
    %898 = vmatpush.bf16.msra.mxu0 %v336
    %899 = vmatpush.bf16.msra.mxu0 %v334
    %900 = vmatpush.bf16.msra.mxu0 %v332
    %901 = vmatmul.bf16.gmra.mxu0 %v892
    %v902 = vpop.f32.mrf.mxu0
    %v903 = vadd.f32 0.0, %v902
    %v904 = vpop.f32.mrf.mxu0
    %905 = vdwg.mxu0
    %906 = vmatpush.bf16.msra.mxu0 %v347
    %907 = vmatpush.bf16.msra.mxu0 %v345
    %908 = vmatpush.bf16.msra.mxu0 %v343
    %909 = vmatpush.bf16.msra.mxu0 %v341
    %910 = vmatpush.bf16.msra.mxu0 %v339
    %911 = vmatpush.bf16.msra.mxu0 %v337
    %912 = vmatpush.bf16.msra.mxu0 %v335
    %913 = vmatpush.bf16.msra.mxu0 %v333
    %914 = vmatmul.bf16.gmra.mxu0 %v892
    %v915 = vpop.f32.mrf.mxu0
    %v916 = vadd.f32 0.0, %v915
    %v917 = vpop.f32.mrf.mxu0
    %918 = vdwg.mxu0
    %v919 = vadd.f32 %v889, %v903
    %v920 = vxor.u32 %v919, 2147483648
    %v921 = vmul.f32 %v920, 1.442695
    %v922 = vpow.pop %v921
    %v923 = vadd.f32 %v922, 1.0
    %v924 = vrcp.pop %v923
    %v925 = vmul.f32 %v923, %v924
    %v926 = vsub.f32 1.0, %v925
    %v927 = vmul.f32 %v924, %v926
    %v928 = vadd.f32 %v924, %v927
    %vm929 = vweird.f32 %v923
    %vm930 = vweird.f32 %v924
    %vm931 = vmor %vm929, %vm930
    %v932 = vsel %vm931, %v924, %v928
    %v933 = vand.u32 2147483647, %v923
    %vm934 = vcmp.eq.f32.partialorder %v933, 8.507059e+37
    %v935 = vand.u32 %v923, 2147483648
    %v936 = vor.u32 1.1754944e-38, %v935
    %v937 = vsel %vm934, %v936, %v932
    %v938 = vmul.f32 1.0, %v937
    %v939 = vadd.f32 %v890, %v916
    %v940 = vxor.u32 %v939, 2147483648
    %v941 = vmul.f32 %v940, 1.442695
    %v942 = vpow.pop %v941
    %v943 = vadd.f32 %v942, 1.0
    %v944 = vrcp.pop %v943
    %v945 = vmul.f32 %v943, %v944
    %v946 = vsub.f32 1.0, %v945
    %v947 = vmul.f32 %v944, %v946
    %v948 = vadd.f32 %v944, %v947
    %vm949 = vweird.f32 %v943
    %vm950 = vweird.f32 %v944
    %vm951 = vmor %vm949, %vm950
    %v952 = vsel %vm951, %v944, %v948
    %v953 = vand.u32 2147483647, %v943
    %vm954 = vcmp.eq.f32.partialorder %v953, 8.507059e+37
    %v955 = vand.u32 %v943, 2147483648
    %v956 = vor.u32 1.1754944e-38, %v955
    %v957 = vsel %vm954, %v956, %v952
    %v958 = vmul.f32 1.0, %v957
    %959 = vmatpush.bf16.msra.mxu0 %v485
    %960 = vmatpush.bf16.msra.mxu0 %v484
    %961 = vmatpush.bf16.msra.mxu0 %v483
    %962 = vmatpush.bf16.msra.mxu0 %v482
    %963 = vmatpush.bf16.msra.mxu0 %v481
    %964 = vmatpush.bf16.msra.mxu0 %v480
    %965 = vmatpush.bf16.msra.mxu0 %v479
    %966 = vmatpush.bf16.msra.mxu0 %v478
    %967 = vmatmul.bf16.gmra.mxu0 %v892
    %v968 = vpop.f32.mrf.mxu0
    %v969 = vadd.f32 %v260, %v968
    %v970 = vpop.f32.mrf.mxu0
    %971 = vdwg.mxu0
    %v972 = vmul.f32 %v938, %v969
    %v973 = vadd.f32 %v891, %v972
    %v974 = vtanh.pop %v973
    %v975 = vsub.f32 1.0, %v958
    %v976 = vmul.f32 %v975, %v974
    %v977 = vmul.f32 %v958, %v885
    %v978 = vadd.f32 %v976, %v977
    %s979 = smul.u32 6, 3
    %s980 = smul.addr %s979, 8
    %s981 = scalar_lea.vmem [#allocation2], %s980
    %v982 = vld [vmem:[%s981] sm:$0xff]
    %v983 = vld [vmem:[%s981 + $0x8] sm:$0xff]
    %v984 = vld [vmem:[%s981 + $0x10] sm:$0xff]
    %v985 = vpack.c.bf16 %v978, %v978
    %986 = vmatpush.bf16.msra.mxu0 %v346
    %987 = vmatpush.bf16.msra.mxu0 %v344
    %988 = vmatpush.bf16.msra.mxu0 %v342
    %989 = vmatpush.bf16.msra.mxu0 %v340
    %990 = vmatpush.bf16.msra.mxu0 %v338
    %991 = vmatpush.bf16.msra.mxu0 %v336
    %992 = vmatpush.bf16.msra.mxu0 %v334
    %993 = vmatpush.bf16.msra.mxu0 %v332
    %994 = vmatmul.bf16.gmra.mxu0 %v985
    %v995 = vpop.f32.mrf.mxu0
    %v996 = vadd.f32 0.0, %v995
    %v997 = vpop.f32.mrf.mxu0
    %998 = vdwg.mxu0
    %999 = vmatpush.bf16.msra.mxu0 %v347
    %1000 = vmatpush.bf16.msra.mxu0 %v345
    %1001 = vmatpush.bf16.msra.mxu0 %v343
    %1002 = vmatpush.bf16.msra.mxu0 %v341
    %1003 = vmatpush.bf16.msra.mxu0 %v339
    %1004 = vmatpush.bf16.msra.mxu0 %v337
    %1005 = vmatpush.bf16.msra.mxu0 %v335
    %1006 = vmatpush.bf16.msra.mxu0 %v333
    %1007 = vmatmul.bf16.gmra.mxu0 %v985
    %v1008 = vpop.f32.mrf.mxu0
    %v1009 = vadd.f32 0.0, %v1008
    %v1010 = vpop.f32.mrf.mxu0
    %1011 = vdwg.mxu0
    %v1012 = vadd.f32 %v982, %v996
    %v1013 = vxor.u32 %v1012, 2147483648
    %v1014 = vmul.f32 %v1013, 1.442695
    %v1015 = vpow.pop %v1014
    %v1016 = vadd.f32 %v1015, 1.0
    %v1017 = vrcp.pop %v1016
    %v1018 = vmul.f32 %v1016, %v1017
    %v1019 = vsub.f32 1.0, %v1018
    %v1020 = vmul.f32 %v1017, %v1019
    %v1021 = vadd.f32 %v1017, %v1020
    %vm1022 = vweird.f32 %v1016
    %vm1023 = vweird.f32 %v1017
    %vm1024 = vmor %vm1022, %vm1023
    %v1025 = vsel %vm1024, %v1017, %v1021
    %v1026 = vand.u32 2147483647, %v1016
    %vm1027 = vcmp.eq.f32.partialorder %v1026, 8.507059e+37
    %v1028 = vand.u32 %v1016, 2147483648
    %v1029 = vor.u32 1.1754944e-38, %v1028
    %v1030 = vsel %vm1027, %v1029, %v1025
    %v1031 = vmul.f32 1.0, %v1030
    %v1032 = vadd.f32 %v983, %v1009
    %v1033 = vxor.u32 %v1032, 2147483648
    %v1034 = vmul.f32 %v1033, 1.442695
    %v1035 = vpow.pop %v1034
    %v1036 = vadd.f32 %v1035, 1.0
    %v1037 = vrcp.pop %v1036
    %v1038 = vmul.f32 %v1036, %v1037
    %v1039 = vsub.f32 1.0, %v1038
    %v1040 = vmul.f32 %v1037, %v1039
    %v1041 = vadd.f32 %v1037, %v1040
    %vm1042 = vweird.f32 %v1036
    %vm1043 = vweird.f32 %v1037
    %vm1044 = vmor %vm1042, %vm1043
    %v1045 = vsel %vm1044, %v1037, %v1041
    %v1046 = vand.u32 2147483647, %v1036
    %vm1047 = vcmp.eq.f32.partialorder %v1046, 8.507059e+37
    %v1048 = vand.u32 %v1036, 2147483648
    %v1049 = vor.u32 1.1754944e-38, %v1048
    %v1050 = vsel %vm1047, %v1049, %v1045
    %v1051 = vmul.f32 1.0, %v1050
    %1052 = vmatpush.bf16.msra.mxu0 %v485
    %1053 = vmatpush.bf16.msra.mxu0 %v484
    %1054 = vmatpush.bf16.msra.mxu0 %v483
    %1055 = vmatpush.bf16.msra.mxu0 %v482
    %1056 = vmatpush.bf16.msra.mxu0 %v481
    %1057 = vmatpush.bf16.msra.mxu0 %v480
    %1058 = vmatpush.bf16.msra.mxu0 %v479
    %1059 = vmatpush.bf16.msra.mxu0 %v478
    %1060 = vmatmul.bf16.gmra.mxu0 %v985
    %v1061 = vpop.f32.mrf.mxu0
    %v1062 = vadd.f32 %v260, %v1061
    %v1063 = vpop.f32.mrf.mxu0
    %1064 = vdwg.mxu0
    %v1065 = vmul.f32 %v1031, %v1062
    %v1066 = vadd.f32 %v984, %v1065
    %v1067 = vtanh.pop %v1066
    %v1068 = vsub.f32 1.0, %v1051
    %v1069 = vmul.f32 %v1068, %v1067
    %v1070 = vmul.f32 %v1051, %v978
    %v1071 = vadd.f32 %v1069, %v1070
    %s1072 = smul.u32 7, 3
    %s1073 = smul.addr %s1072, 8
    %s1074 = scalar_lea.vmem [#allocation2], %s1073
    %v1075 = vld [vmem:[%s1074] sm:$0xff]
    %v1076 = vld [vmem:[%s1074 + $0x8] sm:$0xff]
    %v1077 = vld [vmem:[%s1074 + $0x10] sm:$0xff]
    %v1078 = vpack.c.bf16 %v1071, %v1071
    %1079 = vmatpush.bf16.msra.mxu0 %v346
    %1080 = vmatpush.bf16.msra.mxu0 %v344
    %1081 = vmatpush.bf16.msra.mxu0 %v342
    %1082 = vmatpush.bf16.msra.mxu0 %v340
    %1083 = vmatpush.bf16.msra.mxu0 %v338
    %1084 = vmatpush.bf16.msra.mxu0 %v336
    %1085 = vmatpush.bf16.msra.mxu0 %v334
    %1086 = vmatpush.bf16.msra.mxu0 %v332
    %1087 = vmatmul.bf16.gmra.mxu0 %v1078
    %v1088 = vpop.f32.mrf.mxu0
    %v1089 = vadd.f32 0.0, %v1088
    %v1090 = vpop.f32.mrf.mxu0
    %1091 = vdwg.mxu0
    %1092 = vmatpush.bf16.msra.mxu0 %v347
    %1093 = vmatpush.bf16.msra.mxu0 %v345
    %1094 = vmatpush.bf16.msra.mxu0 %v343
    %1095 = vmatpush.bf16.msra.mxu0 %v341
    %1096 = vmatpush.bf16.msra.mxu0 %v339
    %1097 = vmatpush.bf16.msra.mxu0 %v337
    %1098 = vmatpush.bf16.msra.mxu0 %v335
    %1099 = vmatpush.bf16.msra.mxu0 %v333
    %1100 = vmatmul.bf16.gmra.mxu0 %v1078
    %v1101 = vpop.f32.mrf.mxu0
    %v1102 = vadd.f32 0.0, %v1101
    %v1103 = vpop.f32.mrf.mxu0
    %1104 = vdwg.mxu0
    %v1105 = vadd.f32 %v1075, %v1089
    %v1106 = vxor.u32 %v1105, 2147483648
    %v1107 = vmul.f32 %v1106, 1.442695
    %v1108 = vpow.pop %v1107
    %v1109 = vadd.f32 %v1108, 1.0
    %v1110 = vrcp.pop %v1109
    %v1111 = vmul.f32 %v1109, %v1110
    %v1112 = vsub.f32 1.0, %v1111
    %v1113 = vmul.f32 %v1110, %v1112
    %v1114 = vadd.f32 %v1110, %v1113
    %vm1115 = vweird.f32 %v1109
    %vm1116 = vweird.f32 %v1110
    %vm1117 = vmor %vm1115, %vm1116
    %v1118 = vsel %vm1117, %v1110, %v1114
    %v1119 = vand.u32 2147483647, %v1109
    %vm1120 = vcmp.eq.f32.partialorder %v1119, 8.507059e+37
    %v1121 = vand.u32 %v1109, 2147483648
    %v1122 = vor.u32 1.1754944e-38, %v1121
    %v1123 = vsel %vm1120, %v1122, %v1118
    %v1124 = vmul.f32 1.0, %v1123
    %v1125 = vadd.f32 %v1076, %v1102
    %v1126 = vxor.u32 %v1125, 2147483648
    %v1127 = vmul.f32 %v1126, 1.442695
    %v1128 = vpow.pop %v1127
    %v1129 = vadd.f32 %v1128, 1.0
    %v1130 = vrcp.pop %v1129
    %v1131 = vmul.f32 %v1129, %v1130
    %v1132 = vsub.f32 1.0, %v1131
    %v1133 = vmul.f32 %v1130, %v1132
    %v1134 = vadd.f32 %v1130, %v1133
    %vm1135 = vweird.f32 %v1129
    %vm1136 = vweird.f32 %v1130
    %vm1137 = vmor %vm1135, %vm1136
    %v1138 = vsel %vm1137, %v1130, %v1134
    %v1139 = vand.u32 2147483647, %v1129
    %vm1140 = vcmp.eq.f32.partialorder %v1139, 8.507059e+37
    %v1141 = vand.u32 %v1129, 2147483648
    %v1142 = vor.u32 1.1754944e-38, %v1141
    %v1143 = vsel %vm1140, %v1142, %v1138
    %v1144 = vmul.f32 1.0, %v1143
    %1145 = vmatpush.bf16.msra.mxu0 %v485
    %1146 = vmatpush.bf16.msra.mxu0 %v484
    %1147 = vmatpush.bf16.msra.mxu0 %v483
    %1148 = vmatpush.bf16.msra.mxu0 %v482
    %1149 = vmatpush.bf16.msra.mxu0 %v481
    %1150 = vmatpush.bf16.msra.mxu0 %v480
    %1151 = vmatpush.bf16.msra.mxu0 %v479
    %1152 = vmatpush.bf16.msra.mxu0 %v478
    %1153 = vmatmul.bf16.gmra.mxu0 %v1078
    %v1154 = vpop.f32.mrf.mxu0
    %v1155 = vadd.f32 %v260, %v1154
    %v1156 = vpop.f32.mrf.mxu0
    %1157 = vdwg.mxu0
    %v1158 = vmul.f32 %v1124, %v1155
    %v1159 = vadd.f32 %v1077, %v1158
    %v1160 = vtanh.pop %v1159
    %v1161 = vsub.f32 1.0, %v1144
    %v1162 = vmul.f32 %v1161, %v1160
    %v1163 = vmul.f32 %v1144, %v1071
    %v1164 = vadd.f32 %v1162, %v1163
    %v1165 = vpack.c.bf16 %v1164, %v1164
    %v1166 = vld [vmem:[#allocation8] sm:$0xf]
    %v1167 = vld [vmem:[#allocation8 + $0x4] sm:$0xf]
    %v1168 = vld [vmem:[#allocation8 + $0x8] sm:$0xf]
    %v1169 = vld [vmem:[#allocation8 + $0xc] sm:$0xf]
    %v1170 = vld [vmem:[#allocation8 + $0x10] sm:$0xf]
    %v1171 = vld [vmem:[#allocation8 + $0x14] sm:$0xf]
    %v1172 = vld [vmem:[#allocation8 + $0x18] sm:$0xf]
    %v1173 = vld [vmem:[#allocation8 + $0x1c] sm:$0xf]
    %v1174 = vld [vmem:[#allocation8 + $0x20] sm:$0xf]
    %v1175 = vld [vmem:[#allocation8 + $0x24] sm:$0xf]
    %v1176 = vld [vmem:[#allocation8 + $0x28] sm:$0xf]
    %v1177 = vld [vmem:[#allocation8 + $0x2c] sm:$0xf]
    %v1178 = vld [vmem:[#allocation8 + $0x30] sm:$0xf]
    %v1179 = vld [vmem:[#allocation8 + $0x34] sm:$0xf]
    %v1180 = vld [vmem:[#allocation8 + $0x38] sm:$0xf]
    %v1181 = vld [vmem:[#allocation8 + $0x3c] sm:$0xf]
    %v1182 = vld [vmem:[%s7] sm:$0x1]
    %v1184 = vperm.slane %v1182, 0
    %v1202 = vunpack.c.l.b16 %v1166
    %v1203 = vunpack.c.l.b16 %v1167
    %v1204 = vunpack.c.l.b16 %v1168
    %v1205 = vunpack.c.l.b16 %v1169
    %v1206 = vunpack.c.l.b16 %v1170
    %v1207 = vunpack.c.l.b16 %v1171
    %v1208 = vunpack.c.l.b16 %v1172
    %v1209 = vunpack.c.l.b16 %v1173
    %v1210 = vunpack.c.l.b16 %v1174
    %v1211 = vunpack.c.l.b16 %v1175
    %v1212 = vunpack.c.l.b16 %v1176
    %v1213 = vunpack.c.l.b16 %v1177
    %v1214 = vunpack.c.l.b16 %v1178
    %v1215 = vunpack.c.l.b16 %v1179
    %v1216 = vunpack.c.l.b16 %v1180
    %v1217 = vunpack.c.l.b16 %v1181
    %v1218 = vpack.c.b16 %v1203, %v1202
    %v1219 = vpack.c.b16 %v1205, %v1204
    %v1220 = vpack.c.b16 %v1207, %v1206
    %v1221 = vpack.c.b16 %v1209, %v1208
    %v1222 = vpack.c.b16 %v1211, %v1210
    %v1223 = vpack.c.b16 %v1213, %v1212
    %v1224 = vpack.c.b16 %v1215, %v1214
    %v1225 = vpack.c.b16 %v1217, %v1216
    %1234 = vmatpush.bf16.msra.mxu0 %v1225
    %1235 = vmatpush.bf16.msra.mxu0 %v1224
    %1236 = vmatpush.bf16.msra.mxu0 %v1223
    %1237 = vmatpush.bf16.msra.mxu0 %v1222
    %1238 = vmatpush.bf16.msra.mxu0 %v1221
    %1239 = vmatpush.bf16.msra.mxu0 %v1220
    %1240 = vmatpush.bf16.msra.mxu0 %v1219
    %1241 = vmatpush.bf16.msra.mxu0 %v1218
    %1242 = vmatmul.bf16.gmra.mxu0 %v1165
    %v1243 = vpop.f32.mrf.mxu0
    %v1244 = vadd.f32 %v1184, %v1243
    %v1245 = vpop.f32.mrf.mxu0
    %1246 = vdwg.mxu0
    %1247 = vst [vmem:[#allocation9] sm:$0xff] %v1244
    // Predicated region
    $region46: #{tpu_custom_call.1} parent=1 // pred_check
      _
    $region47: #{tpu_custom_call.1} parent=1 // pred_check_branch
      %1249 = sbr.rel (0) target = $region49
    $region48: #{tpu_custom_call.1} parent=1 // pred_region
      %1251 = vsyncadd [#allocation5], 0
      %s1253 = sshll.u32 [#allocation9], 4
      %s1254 = int_to_ptr.vmem [resolvable:$true] %s1253
      %s1255 = sshll.u32 %s8, 4
      %s1256 = int_to_ptr.hbm [resolvable:$true] %s1255
      %1258 = dma.vmem_to_hbm [thread:$0]  %s1254, 128, %s1256, [#allocation5]
    $region49: #{tpu_custom_call.1} parent=1 // pred_fallthru
      _
    // Predicated region
    $region50: #{tpu_custom_call.1} parent=1 // pred_check
      _
    $region51: #{tpu_custom_call.1} parent=1 // pred_check_branch
      %1260 = sbr.rel (0) target = $region53
    $region52: #{tpu_custom_call.1} parent=1 // pred_region
      %1262 = dma.done [#allocation5], 128
    $region53: #{tpu_custom_call.1} parent=1 // pred_fallthru
      _
    %1263 = vsyncpa [#allocation4], 1
    %1264 = vsyncpa [#allocation7], 1
    %1265 = vsyncpa [#allocation5], 1

</llo_original>
